<compile_context>
chip_gen: v5e
topology: v5e:2x2
jax: 0.10.0
libtpu: 0.0.40
codegen_flags: <defaults>
</compile_context>

<pallas_src>
import functools

import jax
import jax.numpy as jnp
from jax.experimental import pallas as pl
from jax.experimental.pallas import tpu as pltpu

# Operand dtype for the heavy conv matmuls (accumulation stays f32 via
# preferred_element_type).  bf16 gives ~2x MXU throughput on every generation
# (v5e's MXU is natively bf16 too); use jnp.float32 only if bit-level parity
# with the f32 PyTorch reference is required.
_MXU_DTYPE = jnp.bfloat16


# ---------------------------------------------------------------------------
# Fused EEB kernel
# ---------------------------------------------------------------------------
def _make_eeb_kernel(H, W, Cout, Cg, B, relu):
    S = H * W
    BS = B * S
    BHW = B * (H + W)
    taps = [(dy, dx) for dy in (-1, 0, 1) for dx in (-1, 0, 1)]
    f32 = jnp.float32

    def kernel(x_ref, w1_ref, wst_ref, we1_ref, cvec_ref, mask_ref,
               pmat_ref, ehw_ref, savg_ref, sbc_ref, bg_ref,
               out_ref, x1_scr):

        def cvec(k):                       # k-th packed per-channel constant
            return cvec_ref[k * Cout:(k + 1) * Cout, :]          # (Cout, 1)

        def conv3x3(inp, widx):
            # 3x3 conv (stride 1, zero pad 1) on the lane-flattened (Cout, BS)
            # map.  The 9 taps are in-register lane rotations (XLU) with the
            # wrapped positions zeroed by per-tap masks; they are stacked
            # along the contraction axis and fed to ONE bf16 MXU matmul with
            # K = 9*Cout (fills the systolic depth instead of 9 K=Cout dots).
            slabs = []
            for k, (dy, dx) in enumerate(taps):
                shift = (-(dy * W + dx)) % BS
                if shift == 0:
                    slabs.append(inp.astype(_MXU_DTYPE))
                else:
                    s = pltpu.roll(inp, shift, 1) * mask_ref[k:k + 1, :]
                    slabs.append(s.astype(_MXU_DTYPE))
            stacked = jnp.concatenate(slabs, axis=0)             # (9*Cout, BS)
            return jnp.dot(wst_ref[widx], stacked,
                           preferred_element_type=f32)           # (Cout, BS)

        def samplemean(v):                 # (Cout, BS) -> (Cout, B)
            if B == 1:
                return jnp.mean(v, axis=1, keepdims=True)
            return jnp.dot(v, savg_ref[...], preferred_element_type=f32)

        def samplebcast(v):                # (Cout, B) -> broadcast vs (Cout, BS)
            if B == 1:
                return v                   # plain jnp broadcasting
            return jnp.dot(v, sbc_ref[...], preferred_element_type=f32)

        # ---------------- conv1x1 + bias -----------------------------------
        x1 = jnp.dot(w1_ref[...], x_ref[0],
                     preferred_element_type=f32) + cvec(0)       # (Cout, BS)
        x1_scr[...] = x1                   # park until the residual epilogue

        # ---------------- conv2 -> folded BN -> ReLU ------------------------
        r = conv3x3(x1, 0)
        r = jnp.maximum(r * cvec(1) + cvec(2), 0.0)

        # ---------------- conv3 + bias (EMA input) ---------------------------
        r = conv3x3(r, 1) + cvec(3)

        # ---------------- EMA ------------------------------------------------
        # pool_h / pool_w of every sample via one block-diagonal pooling matmul
        pooled = jnp.dot(r, pmat_ref[...], preferred_element_type=f32)
        hw = jnp.dot(we1_ref[...], pooled,
                     preferred_element_type=f32) + cvec(4)       # (Cout, BHW)
        sig = jax.nn.sigmoid(hw)
        # broadcast the H / W attention back onto the flattened spatial lanes
        sig_h = jnp.dot(sig, ehw_ref[:BHW, :], preferred_element_type=f32)
        sig_w = jnp.dot(sig, ehw_ref[BHW:, :], preferred_element_type=f32)
        gated = r * sig_h * sig_w

        # GroupNorm(Cg, Cg) == per-(channel, sample) spatial normalization
        mu = samplebcast(samplemean(gated))
        cen = gated - mu
        var = samplemean(cen * cen)
        inv = samplebcast(jax.lax.rsqrt(var + 1e-5))
        x1n = cen * inv * cvec(6) + cvec(7)

        # EMA grouped 3x3 conv (block-diagonal weights -> one fused conv)
        x2 = conv3x3(r, 2) + cvec(5)

        # per-(sample, group) channel softmax of the pooled descriptors
        bg = bg_ref[...]
        a1 = samplemean(x1n)
        a2 = samplemean(x2)

        def group_softmax(a):
            # subtracting the within-group mean is an exact softmax invariance
            # (keeps everything matmul-shaped; descriptors here are O(1)).
            shift = jnp.dot(bg, a, preferred_element_type=f32) * (1.0 / Cg)
            e = jnp.exp(a - shift)
            den = jnp.dot(bg, e, preferred_element_type=f32)
            return e / den

        sm1 = samplebcast(group_softmax(a1))
        sm2 = samplebcast(group_softmax(a2))

        # cross-spatial weights, summed within each group & broadcast back
        wmap = jnp.dot(bg, sm1 * x2 + sm2 * x1n,
                       preferred_element_type=f32)
        ema = r * jax.nn.sigmoid(wmap)

        # ---------------- residual + optional ReLU ---------------------------
        res = x1_scr[...] + ema
        if relu:
            res = jnp.maximum(res, 0.0)
        out_ref[0] = res

    return kernel


def _pick_batch_block(n, spatial, max_lanes=2048):
    """Largest batch block that divides N, keeps the lane axis <= max_lanes
    and leaves >= 2 grid steps (so both v7x TensorCores get work)."""
    best = 1
    for b in range(1, n + 1):
        if n % b:
            continue
        if b * spatial > max_lanes:
            continue
        if n >= 2 and n // b < 2:
            continue
        best = b
    return best


# ---------------------------------------------------------------------------
# Wrapper: parameter folding + pallas_call
# ---------------------------------------------------------------------------
def eeb_forward(x, params, groups, relu=True, batch_block=None):
    N, Cin, H, W = x.shape
    Cout = params["conv1_w"].shape[0]
    Cg = Cout // groups
    S = H * W
    f32 = jnp.float32

    B = _pick_batch_block(N, S) if batch_block is None else batch_block
    assert N % B == 0
    Nb = N // B
    BS = B * S

    # ---- fold / reshape parameters (tiny host-side glue, fused by XLA) -----
    eye_g = jnp.eye(groups, dtype=f32)

    def stack_taps(w):       # (Co, Ci, 3, 3) -> (Co, 9*Ci), tap-major columns
        co, ci = w.shape[0], w.shape[1]
        return w.transpose(0, 2, 3, 1).reshape(co, 9 * ci)

    def stack_taps_grouped(w):   # (Cg, Cg, 3, 3) -> block-diag (Cout, 9*Cout)
        t = w.transpose(2, 3, 0, 1).reshape(9, Cg, Cg)
        t = jax.vmap(lambda m: jnp.kron(eye_g, m))(t)            # (9, Cout, Cout)
        return t.transpose(1, 0, 2).reshape(Cout, 9 * Cout)

    w1 = params["conv1_w"].reshape(Cout, Cin).astype(f32)
    wst = jnp.stack([stack_taps(params["conv2_w"]),
                     stack_taps(params["conv3_w"]),
                     stack_taps_grouped(params["ema_conv3_w"])],
                    axis=0).astype(_MXU_DTYPE)                   # (3, Cout, 9*Cout)

    scale = params["bn_gamma"] * jax.lax.rsqrt(params["bn_var"] + 1e-5)
    cvec = jnp.concatenate([
        params["conv1_b"],                                                  # 0 b1
        scale,                                                              # 1 bn scale
        params["bn_beta"] + (params["conv2_b"] - params["bn_mean"]) * scale,  # 2 bn shift
        params["conv3_b"],                                                  # 3 b3
        jnp.tile(params["ema_conv1_b"], groups),                            # 4 be1
        jnp.tile(params["ema_conv3_b"], groups),                            # 5 be3
        jnp.tile(params["ema_gn_w"], groups),                               # 6 gnw
        jnp.tile(params["ema_gn_b"], groups),                               # 7 gnb
    ]).astype(f32).reshape(8 * Cout, 1)

    we1 = jnp.kron(eye_g, params["ema_conv1_w"].reshape(Cg, Cg)).astype(f32)
    bg = jnp.kron(eye_g, jnp.ones((Cg, Cg), f32))     # within-group sum matrix

    # spatial helper matrices (per-sample blocks, kron-tiled over the B block)
    s_idx = jnp.arange(S)
    row = s_idx // W
    col = s_idx % W
    eye_b = jnp.eye(B, dtype=f32)
    ph = (row[:, None] == jnp.arange(H)[None, :]).astype(f32) / W
    pw = (col[:, None] == jnp.arange(W)[None, :]).astype(f32) / H
    pmat = jnp.kron(eye_b, jnp.concatenate([ph, pw], axis=1))    # (BS, B*(H+W))
    eh = jnp.concatenate(
        [(jnp.arange(H)[:, None] == row[None, :]).astype(f32),
         jnp.zeros((W, S), f32)], axis=0)                        # (H+W, S)
    ew = jnp.concatenate(
        [jnp.zeros((H, S), f32),
         (jnp.arange(W)[:, None] == col[None, :]).astype(f32)], axis=0)
    ehw = jnp.concatenate([jnp.kron(eye_b, eh), jnp.kron(eye_b, ew)],
                          axis=0)                                # (2*B*(H+W), BS)
    savg = jnp.kron(eye_b, jnp.ones((S, 1), f32) / S)            # (BS, B)
    sbc = jnp.kron(eye_b, jnp.ones((1, S), f32))                 # (B, BS)

    # per-tap wrap-around masks for the flattened-spatial lane rotations
    mrows = []
    for dy in (-1, 0, 1):
        for dx in (-1, 0, 1):
            ok = jnp.ones((S,), f32)
            if dy == -1:
                ok = ok * (row != 0)
            elif dy == 1:
                ok = ok * (row != H - 1)
            if dx == -1:
                ok = ok * (col != 0)
            elif dx == 1:
                ok = ok * (col != W - 1)
            mrows.append(ok)
    mask = jnp.tile(jnp.stack(mrows, axis=0), (1, B))            # (9, BS)

    # lane-concatenate B samples per grid step (host-side layout plumbing so
    # every kernel load/store is lane-dense)
    xb = x.astype(f32).reshape(Nb, B, Cin, S).transpose(0, 2, 1, 3)
    xb = xb.reshape(Nb, Cin, BS)

    const_inputs = (w1, wst, we1, cvec, mask, pmat, ehw, savg, sbc, bg)

    def _const_spec(a):
        nd = a.ndim
        return pl.BlockSpec(a.shape, lambda n: (0,) * nd)

    kernel = _make_eeb_kernel(H, W, Cout, Cg, B, relu)
    out = pl.pallas_call(
        kernel,
        out_shape=jax.ShapeDtypeStruct((Nb, Cout, BS), f32),
        grid=(Nb,),
        in_specs=[pl.BlockSpec((1, Cin, BS), lambda n: (n, 0, 0))] +
                 [_const_spec(a) for a in const_inputs],
        out_specs=pl.BlockSpec((1, Cout, BS), lambda n: (n, 0, 0)),
        scratch_shapes=[pltpu.VMEM((Cout, BS), f32)],
        compiler_params=pltpu.CompilerParams(
            dimension_semantics=("parallel",),
            vmem_limit_bytes=32 * 1024 * 1024),
    )(xb, *const_inputs)
    out = out.reshape(Nb, Cout, B, S).transpose(0, 2, 1, 3).reshape(N, Cout, H, W)
    return out


# ---------------------------------------------------------------------------
# Pure-JAX (XLA) reference used to validate the fused Pallas kernel
# ---------------------------------------------------------------------------
def eeb_reference(x, params, groups, relu=True):
    N, Cin, H, W = x.shape
    Cout = params["conv1_w"].shape[0]
    Cg = Cout // groups

    def conv(inp, w, b, pad):
        out = jax.lax.conv_general_dilated(
            inp, w, window_strides=(1, 1),
            padding=[(pad, pad), (pad, pad)],
            dimension_numbers=("NCHW", "OIHW", "NCHW"))
        return out + b.reshape(1, -1, 1, 1)

    x1 = conv(x, params["conv1_w"], params["conv1_b"], 0)
    r = conv(x1, params["conv2_w"], params["conv2_b"], 1)
    scale = params["bn_gamma"] * jax.lax.rsqrt(params["bn_var"] + 1e-5)
    r = ((r - params["bn_mean"].reshape(1, -1, 1, 1)) * scale.reshape(1, -1, 1, 1)
         + params["bn_beta"].reshape(1, -1, 1, 1))
    r = jnp.maximum(r, 0.0)
    r = conv(r, params["conv3_w"], params["conv3_b"], 1)

    # canonical EMA (factor == groups)
    g = r.reshape(N * groups, Cg, H, W)
    x_h = jnp.mean(g, axis=3, keepdims=True)                        # (NG,Cg,H,1)
    x_w = jnp.mean(g, axis=2, keepdims=True).transpose(0, 1, 3, 2)  # (NG,Cg,W,1)
    hw = conv(jnp.concatenate([x_h, x_w], axis=2),
              params["ema_conv1_w"], params["ema_conv1_b"], 0)
    s_h = jax.nn.sigmoid(hw[:, :, :H, :])
    s_w = jax.nn.sigmoid(hw[:, :, H:, :]).transpose(0, 1, 3, 2)
    gated = g * s_h * s_w
    mu = jnp.mean(gated, axis=(2, 3), keepdims=True)
    var = jnp.mean(jnp.square(gated - mu), axis=(2, 3), keepdims=True)
    x1n = (gated - mu) * jax.lax.rsqrt(var + 1e-5)
    x1n = (x1n * params["ema_gn_w"].reshape(1, -1, 1, 1)
           + params["ema_gn_b"].reshape(1, -1, 1, 1))
    x2 = conv(g, params["ema_conv3_w"], params["ema_conv3_b"], 1)
    a1 = jax.nn.softmax(jnp.mean(x1n, axis=(2, 3)), axis=-1)        # (NG, Cg)
    a2 = jax.nn.softmax(jnp.mean(x2, axis=(2, 3)), axis=-1)
    wmap = (jnp.einsum("nc,nchw->nhw", a1, x2)
            + jnp.einsum("nc,nchw->nhw", a2, x1n))[:, None, :, :]
    ema = (g * jax.nn.sigmoid(wmap)).reshape(N, Cout, H, W)

    res = x1 + ema
    return jnp.maximum(res, 0.0) if relu else res


# ---------------------------------------------------------------------------
# Deterministic parameter initialization (shapes follow the PyTorch module)
# ---------------------------------------------------------------------------
def init_params(key, in_channels, out_channels, groups):
    Cg = out_channels // groups
    ks = jax.random.split(key, 12)

    def u(k, shape, fan_in):
        bound = 1.0 / jnp.sqrt(float(fan_in))
        return jax.random.uniform(k, shape, jnp.float32, -bound, bound)

    return {
        "conv1_w": u(ks[0], (out_channels, in_channels, 1, 1), in_channels),
        "conv1_b": u(ks[1], (out_channels,), in_channels),
        "conv2_w": u(ks[2], (out_channels, out_channels, 3, 3), out_channels * 9),
        "conv2_b": u(ks[3], (out_channels,), out_channels * 9),
        "conv3_w": u(ks[4], (out_channels, out_channels, 3, 3), out_channels * 9),
        "conv3_b": u(ks[5], (out_channels,), out_channels * 9),
        "bn_gamma": jnp.ones((out_channels,), jnp.float32),
        "bn_beta": jnp.zeros((out_channels,), jnp.float32),
        "bn_mean": 0.1 * jax.random.normal(ks[6], (out_channels,), jnp.float32),
        "bn_var": jnp.abs(jax.random.normal(ks[7], (out_channels,), jnp.float32)) + 0.5,
        "ema_conv1_w": u(ks[8], (Cg, Cg, 1, 1), Cg),
        "ema_conv1_b": u(ks[9], (Cg,), Cg),
        "ema_conv3_w": u(ks[10], (Cg, Cg, 3, 3), Cg * 9),
        "ema_conv3_b": u(ks[11], (Cg,), Cg * 9),
        "ema_gn_w": jnp.ones((Cg,), jnp.float32),
        "ema_gn_b": jnp.zeros((Cg,), jnp.float32),
    }


if __name__ == "__main__":
    key = jax.random.PRNGKey(0)
    kx, kp = jax.random.split(key)

    N, in_channels, out_channels, H, W = 2, 4, 16, 16, 16
    groups = 8  # EMA default factor

    x = jax.random.normal(kx, (N, in_channels, H, W), jnp.float32)
    params = init_params(kp, in_channels, out_channels, groups)

    fwd = jax.jit(functools.partial(eeb_forward, groups=groups, relu=True))
    out = fwd(x, params)
    jax.block_until_ready(out)

    assert out.shape == (N, out_channels, H, W)
    assert bool(jnp.all(jnp.isfinite(out)))

    ref = eeb_reference(x, params, groups, relu=True)
    max_err = float(jnp.max(jnp.abs(out - ref)))
    assert bool(jnp.allclose(out, ref, rtol=5e-2, atol=5e-2)), max_err

    print("KERNEL_OK")
</pallas_src>

<mosaic_0001>
module attributes {stable_mosaic.version = 11 : i64} {
  func.func @kernel(%arg0: i32, %arg1: memref<1x4x256xf32, #tpu.memory_space<vmem>>, %arg2: memref<16x4xf32, #tpu.memory_space<vmem>>, %arg3: memref<3x16x144xbf16, #tpu.memory_space<vmem>>, %arg4: memref<16x16xf32, #tpu.memory_space<vmem>>, %arg5: memref<128x1xf32, #tpu.memory_space<vmem>>, %arg6: memref<9x256xf32, #tpu.memory_space<vmem>>, %arg7: memref<256x32xf32, #tpu.memory_space<vmem>>, %arg8: memref<64x256xf32, #tpu.memory_space<vmem>>, %arg9: memref<256x1xf32, #tpu.memory_space<vmem>>, %arg10: memref<1x256xf32, #tpu.memory_space<vmem>>, %arg11: memref<16x16xf32, #tpu.memory_space<vmem>>, %arg12: memref<1x16x256xf32, #tpu.memory_space<vmem>>, %arg13: memref<16x256xf32, #tpu.memory_space<vmem>>) attributes {dimension_semantics = [#tpu.dimension_semantics<parallel>], iteration_bounds = array<i64: 2>, scalar_prefetch = 0 : i64, scratch_operands = 1 : i64, tpu.core_type = #tpu.core_type<tc>, window_params = [{transform_indices = @transform_0, window_bounds = array<i64: 1, 4, 256>}, {pipeline_mode = #tpu.pipeline_mode<synchronous>, transform_indices = @transform_1, window_bounds = array<i64: 16, 4>}, {pipeline_mode = #tpu.pipeline_mode<synchronous>, transform_indices = @transform_2, window_bounds = array<i64: 3, 16, 144>}, {pipeline_mode = #tpu.pipeline_mode<synchronous>, transform_indices = @transform_3, window_bounds = array<i64: 16, 16>}, {pipeline_mode = #tpu.pipeline_mode<synchronous>, transform_indices = @transform_4, window_bounds = array<i64: 128, 1>}, {pipeline_mode = #tpu.pipeline_mode<synchronous>, transform_indices = @transform_5, window_bounds = array<i64: 9, 256>}, {pipeline_mode = #tpu.pipeline_mode<synchronous>, transform_indices = @transform_6, window_bounds = array<i64: 256, 32>}, {pipeline_mode = #tpu.pipeline_mode<synchronous>, transform_indices = @transform_7, window_bounds = array<i64: 64, 256>}, {pipeline_mode = #tpu.pipeline_mode<synchronous>, transform_indices = @transform_8, window_bounds = array<i64: 256, 1>}, {pipeline_mode = #tpu.pipeline_mode<synchronous>, transform_indices = @transform_9, window_bounds = array<i64: 1, 256>}, {pipeline_mode = #tpu.pipeline_mode<synchronous>, transform_indices = @transform_10, window_bounds = array<i64: 16, 16>}, {transform_indices = @transform_11, window_bounds = array<i64: 1, 16, 256>}]} {
    %c0 = arith.constant 0 : index
    %c0_0 = arith.constant 0 : index
    %0 = vector.load %arg2[%c0, %c0_0] : memref<16x4xf32, #tpu.memory_space<vmem>>, vector<16x4xf32>
    %c0_1 = arith.constant 0 : index
    %c0_2 = arith.constant 0 : index
    %c0_3 = arith.constant 0 : index
    %1 = vector.load %arg1[%c0_1, %c0_2, %c0_3] : memref<1x4x256xf32, #tpu.memory_space<vmem>>, vector<1x4x256xf32>
    %2 = vector.shape_cast %1 : vector<1x4x256xf32> to vector<4x256xf32>
    %cst = arith.constant dense<0.000000e+00> : vector<16x256xf32>
    %3 = tpu.matmul %0, %2, %cst {dimension_numbers = #tpu.dot_dimension_numbers<[1], [0], [0], [1], [0, 0, 1, 1], [], []>} : vector<16x4xf32>, vector<4x256xf32>, vector<16x256xf32> -> vector<16x256xf32>
    %c0_4 = arith.constant 0 : index
    %c0_5 = arith.constant 0 : index
    %4 = vector.load %arg5[%c0_4, %c0_5] : memref<128x1xf32, #tpu.memory_space<vmem>>, vector<16x1xf32>
    %5 = vector.broadcast %4 : vector<16x1xf32> to vector<16x256xf32>
    %6 = arith.addf %3, %5 : vector<16x256xf32>
    %c0_6 = arith.constant 0 : index
    %c0_7 = arith.constant 0 : index
    %7 = vector.load %arg13[%c0_6, %c0_7] : memref<16x256xf32, #tpu.memory_space<vmem>>, vector<16x256xf32>
    tpu.vector_store %arg13[%c0_6, %c0_7], %6 {strides = array<i32>} : memref<16x256xf32, #tpu.memory_space<vmem>>, vector<16x256xf32>,
    %c17_i32 = arith.constant 17 : i32
    %8 = tpu.dynamic_rotate %6 by %c17_i32 dim 1 : vector<16x256xf32>, i32 -> vector<16x256xf32>
    %c0_8 = arith.constant 0 : index
    %c0_9 = arith.constant 0 : index
    %9 = vector.load %arg6[%c0_8, %c0_9] : memref<9x256xf32, #tpu.memory_space<vmem>>, vector<1x256xf32>
    %10 = vector.broadcast %9 : vector<1x256xf32> to vector<16x256xf32>
    %11 = arith.mulf %8, %10 : vector<16x256xf32>
    %12 = arith.truncf %11 : vector<16x256xf32> to vector<16x256xbf16>
    %c16_i32 = arith.constant 16 : i32
    %13 = tpu.dynamic_rotate %6 by %c16_i32 dim 1 : vector<16x256xf32>, i32 -> vector<16x256xf32>
    %c1 = arith.constant 1 : index
    %c0_10 = arith.constant 0 : index
    %14 = vector.load %arg6[%c1, %c0_10] : memref<9x256xf32, #tpu.memory_space<vmem>>, vector<1x256xf32>
    %15 = vector.broadcast %14 : vector<1x256xf32> to vector<16x256xf32>
    %16 = arith.mulf %13, %15 : vector<16x256xf32>
    %17 = arith.truncf %16 : vector<16x256xf32> to vector<16x256xbf16>
    %c15_i32 = arith.constant 15 : i32
    %18 = tpu.dynamic_rotate %6 by %c15_i32 dim 1 : vector<16x256xf32>, i32 -> vector<16x256xf32>
    %c2 = arith.constant 2 : index
    %c0_11 = arith.constant 0 : index
    %19 = vector.load %arg6[%c2, %c0_11] : memref<9x256xf32, #tpu.memory_space<vmem>>, vector<1x256xf32>
    %20 = vector.broadcast %19 : vector<1x256xf32> to vector<16x256xf32>
    %21 = arith.mulf %18, %20 : vector<16x256xf32>
    %22 = arith.truncf %21 : vector<16x256xf32> to vector<16x256xbf16>
    %c1_i32 = arith.constant 1 : i32
    %23 = tpu.dynamic_rotate %6 by %c1_i32 dim 1 : vector<16x256xf32>, i32 -> vector<16x256xf32>
    %c3 = arith.constant 3 : index
    %c0_12 = arith.constant 0 : index
    %24 = vector.load %arg6[%c3, %c0_12] : memref<9x256xf32, #tpu.memory_space<vmem>>, vector<1x256xf32>
    %25 = vector.broadcast %24 : vector<1x256xf32> to vector<16x256xf32>
    %26 = arith.mulf %23, %25 : vector<16x256xf32>
    %27 = arith.truncf %26 : vector<16x256xf32> to vector<16x256xbf16>
    %28 = arith.truncf %6 : vector<16x256xf32> to vector<16x256xbf16>
    %c255_i32 = arith.constant 255 : i32
    %29 = tpu.dynamic_rotate %6 by %c255_i32 dim 1 : vector<16x256xf32>, i32 -> vector<16x256xf32>
    %c5 = arith.constant 5 : index
    %c0_13 = arith.constant 0 : index
    %30 = vector.load %arg6[%c5, %c0_13] : memref<9x256xf32, #tpu.memory_space<vmem>>, vector<1x256xf32>
    %31 = vector.broadcast %30 : vector<1x256xf32> to vector<16x256xf32>
    %32 = arith.mulf %29, %31 : vector<16x256xf32>
    %33 = arith.truncf %32 : vector<16x256xf32> to vector<16x256xbf16>
    %c241_i32 = arith.constant 241 : i32
    %34 = tpu.dynamic_rotate %6 by %c241_i32 dim 1 : vector<16x256xf32>, i32 -> vector<16x256xf32>
    %c6 = arith.constant 6 : index
    %c0_14 = arith.constant 0 : index
    %35 = vector.load %arg6[%c6, %c0_14] : memref<9x256xf32, #tpu.memory_space<vmem>>, vector<1x256xf32>
    %36 = vector.broadcast %35 : vector<1x256xf32> to vector<16x256xf32>
    %37 = arith.mulf %34, %36 : vector<16x256xf32>
    %38 = arith.truncf %37 : vector<16x256xf32> to vector<16x256xbf16>
    %c240_i32 = arith.constant 240 : i32
    %39 = tpu.dynamic_rotate %6 by %c240_i32 dim 1 : vector<16x256xf32>, i32 -> vector<16x256xf32>
    %c7 = arith.constant 7 : index
    %c0_15 = arith.constant 0 : index
    %40 = vector.load %arg6[%c7, %c0_15] : memref<9x256xf32, #tpu.memory_space<vmem>>, vector<1x256xf32>
    %41 = vector.broadcast %40 : vector<1x256xf32> to vector<16x256xf32>
    %42 = arith.mulf %39, %41 : vector<16x256xf32>
    %43 = arith.truncf %42 : vector<16x256xf32> to vector<16x256xbf16>
    %c239_i32 = arith.constant 239 : i32
    %44 = tpu.dynamic_rotate %6 by %c239_i32 dim 1 : vector<16x256xf32>, i32 -> vector<16x256xf32>
    %c8 = arith.constant 8 : index
    %c0_16 = arith.constant 0 : index
    %45 = vector.load %arg6[%c8, %c0_16] : memref<9x256xf32, #tpu.memory_space<vmem>>, vector<1x256xf32>
    %46 = vector.broadcast %45 : vector<1x256xf32> to vector<16x256xf32>
    %47 = arith.mulf %44, %46 : vector<16x256xf32>
    %48 = arith.truncf %47 : vector<16x256xf32> to vector<16x256xbf16>
    %49 = tpu.concatenate %12, %17, %22, %27, %28, %33, %38, %43, %48 in 0 : vector<16x256xbf16>, vector<16x256xbf16>, vector<16x256xbf16>, vector<16x256xbf16>, vector<16x256xbf16>, vector<16x256xbf16>, vector<16x256xbf16>, vector<16x256xbf16>, vector<16x256xbf16> -> vector<144x256xbf16>
    %c0_17 = arith.constant 0 : index
    %c0_18 = arith.constant 0 : index
    %c0_19 = arith.constant 0 : index
    %50 = vector.load %arg3[%c0_17, %c0_18, %c0_19] : memref<3x16x144xbf16, #tpu.memory_space<vmem>>, vector<1x16x144xbf16>
    %51 = vector.shape_cast %50 : vector<1x16x144xbf16> to vector<16x144xbf16>
    %cst_20 = arith.constant dense<0.000000e+00> : vector<16x256xf32>
    %52 = tpu.matmul %51, %49, %cst_20 {dimension_numbers = #tpu.dot_dimension_numbers<[1], [0], [0], [1], [0, 0, 1, 1], [], []>} : vector<16x144xbf16>, vector<144x256xbf16>, vector<16x256xf32> -> vector<16x256xf32>
    %c16 = arith.constant 16 : index
    %c0_21 = arith.constant 0 : index
    %53 = vector.load %arg5[%c16, %c0_21] : memref<128x1xf32, #tpu.memory_space<vmem>>, vector<16x1xf32>
    %54 = vector.broadcast %53 : vector<16x1xf32> to vector<16x256xf32>
    %55 = arith.mulf %52, %54 : vector<16x256xf32>
    %c32 = arith.constant 32 : index
    %c0_22 = arith.constant 0 : index
    %56 = vector.load %arg5[%c32, %c0_22] : memref<128x1xf32, #tpu.memory_space<vmem>>, vector<16x1xf32>
    %57 = vector.broadcast %56 : vector<16x1xf32> to vector<16x256xf32>
    %58 = arith.addf %55, %57 : vector<16x256xf32>
    %cst_23 = arith.constant 0.000000e+00 : f32
    %59 = vector.broadcast %cst_23 : f32 to vector<16x256xf32>
    %60 = arith.maximumf %58, %59 : vector<16x256xf32>
    %c17_i32_24 = arith.constant 17 : i32
    %61 = tpu.dynamic_rotate %60 by %c17_i32_24 dim 1 : vector<16x256xf32>, i32 -> vector<16x256xf32>
    %c0_25 = arith.constant 0 : index
    %c0_26 = arith.constant 0 : index
    %62 = vector.load %arg6[%c0_25, %c0_26] : memref<9x256xf32, #tpu.memory_space<vmem>>, vector<1x256xf32>
    %63 = vector.broadcast %62 : vector<1x256xf32> to vector<16x256xf32>
    %64 = arith.mulf %61, %63 : vector<16x256xf32>
    %65 = arith.truncf %64 : vector<16x256xf32> to vector<16x256xbf16>
    %c16_i32_27 = arith.constant 16 : i32
    %66 = tpu.dynamic_rotate %60 by %c16_i32_27 dim 1 : vector<16x256xf32>, i32 -> vector<16x256xf32>
    %c1_28 = arith.constant 1 : index
    %c0_29 = arith.constant 0 : index
    %67 = vector.load %arg6[%c1_28, %c0_29] : memref<9x256xf32, #tpu.memory_space<vmem>>, vector<1x256xf32>
    %68 = vector.broadcast %67 : vector<1x256xf32> to vector<16x256xf32>
    %69 = arith.mulf %66, %68 : vector<16x256xf32>
    %70 = arith.truncf %69 : vector<16x256xf32> to vector<16x256xbf16>
    %c15_i32_30 = arith.constant 15 : i32
    %71 = tpu.dynamic_rotate %60 by %c15_i32_30 dim 1 : vector<16x256xf32>, i32 -> vector<16x256xf32>
    %c2_31 = arith.constant 2 : index
    %c0_32 = arith.constant 0 : index
    %72 = vector.load %arg6[%c2_31, %c0_32] : memref<9x256xf32, #tpu.memory_space<vmem>>, vector<1x256xf32>
    %73 = vector.broadcast %72 : vector<1x256xf32> to vector<16x256xf32>
    %74 = arith.mulf %71, %73 : vector<16x256xf32>
    %75 = arith.truncf %74 : vector<16x256xf32> to vector<16x256xbf16>
    %c1_i32_33 = arith.constant 1 : i32
    %76 = tpu.dynamic_rotate %60 by %c1_i32_33 dim 1 : vector<16x256xf32>, i32 -> vector<16x256xf32>
    %c3_34 = arith.constant 3 : index
    %c0_35 = arith.constant 0 : index
    %77 = vector.load %arg6[%c3_34, %c0_35] : memref<9x256xf32, #tpu.memory_space<vmem>>, vector<1x256xf32>
    %78 = vector.broadcast %77 : vector<1x256xf32> to vector<16x256xf32>
    %79 = arith.mulf %76, %78 : vector<16x256xf32>
    %80 = arith.truncf %79 : vector<16x256xf32> to vector<16x256xbf16>
    %81 = arith.truncf %60 : vector<16x256xf32> to vector<16x256xbf16>
    %c255_i32_36 = arith.constant 255 : i32
    %82 = tpu.dynamic_rotate %60 by %c255_i32_36 dim 1 : vector<16x256xf32>, i32 -> vector<16x256xf32>
    %c5_37 = arith.constant 5 : index
    %c0_38 = arith.constant 0 : index
    %83 = vector.load %arg6[%c5_37, %c0_38] : memref<9x256xf32, #tpu.memory_space<vmem>>, vector<1x256xf32>
    %84 = vector.broadcast %83 : vector<1x256xf32> to vector<16x256xf32>
    %85 = arith.mulf %82, %84 : vector<16x256xf32>
    %86 = arith.truncf %85 : vector<16x256xf32> to vector<16x256xbf16>
    %c241_i32_39 = arith.constant 241 : i32
    %87 = tpu.dynamic_rotate %60 by %c241_i32_39 dim 1 : vector<16x256xf32>, i32 -> vector<16x256xf32>
    %c6_40 = arith.constant 6 : index
    %c0_41 = arith.constant 0 : index
    %88 = vector.load %arg6[%c6_40, %c0_41] : memref<9x256xf32, #tpu.memory_space<vmem>>, vector<1x256xf32>
    %89 = vector.broadcast %88 : vector<1x256xf32> to vector<16x256xf32>
    %90 = arith.mulf %87, %89 : vector<16x256xf32>
    %91 = arith.truncf %90 : vector<16x256xf32> to vector<16x256xbf16>
    %c240_i32_42 = arith.constant 240 : i32
    %92 = tpu.dynamic_rotate %60 by %c240_i32_42 dim 1 : vector<16x256xf32>, i32 -> vector<16x256xf32>
    %c7_43 = arith.constant 7 : index
    %c0_44 = arith.constant 0 : index
    %93 = vector.load %arg6[%c7_43, %c0_44] : memref<9x256xf32, #tpu.memory_space<vmem>>, vector<1x256xf32>
    %94 = vector.broadcast %93 : vector<1x256xf32> to vector<16x256xf32>
    %95 = arith.mulf %92, %94 : vector<16x256xf32>
    %96 = arith.truncf %95 : vector<16x256xf32> to vector<16x256xbf16>
    %c239_i32_45 = arith.constant 239 : i32
    %97 = tpu.dynamic_rotate %60 by %c239_i32_45 dim 1 : vector<16x256xf32>, i32 -> vector<16x256xf32>
    %c8_46 = arith.constant 8 : index
    %c0_47 = arith.constant 0 : index
    %98 = vector.load %arg6[%c8_46, %c0_47] : memref<9x256xf32, #tpu.memory_space<vmem>>, vector<1x256xf32>
    %99 = vector.broadcast %98 : vector<1x256xf32> to vector<16x256xf32>
    %100 = arith.mulf %97, %99 : vector<16x256xf32>
    %101 = arith.truncf %100 : vector<16x256xf32> to vector<16x256xbf16>
    %102 = tpu.concatenate %65, %70, %75, %80, %81, %86, %91, %96, %101 in 0 : vector<16x256xbf16>, vector<16x256xbf16>, vector<16x256xbf16>, vector<16x256xbf16>, vector<16x256xbf16>, vector<16x256xbf16>, vector<16x256xbf16>, vector<16x256xbf16>, vector<16x256xbf16> -> vector<144x256xbf16>
    %c1_48 = arith.constant 1 : index
    %c0_49 = arith.constant 0 : index
    %c0_50 = arith.constant 0 : index
    %103 = vector.load %arg3[%c1_48, %c0_49, %c0_50] : memref<3x16x144xbf16, #tpu.memory_space<vmem>>, vector<1x16x144xbf16>
    %104 = vector.shape_cast %103 : vector<1x16x144xbf16> to vector<16x144xbf16>
    %cst_51 = arith.constant dense<0.000000e+00> : vector<16x256xf32>
    %105 = tpu.matmul %104, %102, %cst_51 {dimension_numbers = #tpu.dot_dimension_numbers<[1], [0], [0], [1], [0, 0, 1, 1], [], []>} : vector<16x144xbf16>, vector<144x256xbf16>, vector<16x256xf32> -> vector<16x256xf32>
    %c48 = arith.constant 48 : index
    %c0_52 = arith.constant 0 : index
    %106 = vector.load %arg5[%c48, %c0_52] : memref<128x1xf32, #tpu.memory_space<vmem>>, vector<16x1xf32>
    %107 = vector.broadcast %106 : vector<16x1xf32> to vector<16x256xf32>
    %108 = arith.addf %105, %107 : vector<16x256xf32>
    %c0_53 = arith.constant 0 : index
    %c0_54 = arith.constant 0 : index
    %109 = vector.load %arg7[%c0_53, %c0_54] : memref<256x32xf32, #tpu.memory_space<vmem>>, vector<256x32xf32>
    %cst_55 = arith.constant dense<0.000000e+00> : vector<16x32xf32>
    %110 = tpu.matmul %108, %109, %cst_55 {dimension_numbers = #tpu.dot_dimension_numbers<[1], [0], [0], [1], [0, 0, 1, 1], [], []>} : vector<16x256xf32>, vector<256x32xf32>, vector<16x32xf32> -> vector<16x32xf32>
    %c0_56 = arith.constant 0 : index
    %c0_57 = arith.constant 0 : index
    %111 = vector.load %arg4[%c0_56, %c0_57] : memref<16x16xf32, #tpu.memory_space<vmem>>, vector<16x16xf32>
    %cst_58 = arith.constant dense<0.000000e+00> : vector<16x32xf32>
    %112 = tpu.matmul %111, %110, %cst_58 {dimension_numbers = #tpu.dot_dimension_numbers<[1], [0], [0], [1], [0, 0, 1, 1], [], []>} : vector<16x16xf32>, vector<16x32xf32>, vector<16x32xf32> -> vector<16x32xf32>
    %c64 = arith.constant 64 : index
    %c0_59 = arith.constant 0 : index
    %113 = vector.load %arg5[%c64, %c0_59] : memref<128x1xf32, #tpu.memory_space<vmem>>, vector<16x1xf32>
    %114 = vector.broadcast %113 : vector<16x1xf32> to vector<16x32xf32>
    %115 = arith.addf %112, %114 : vector<16x32xf32>
    %116 = arith.negf %115 : vector<16x32xf32>
    %117 = math.exp %116 : vector<16x32xf32>
    %cst_60 = arith.constant 1.000000e+00 : f32
    %118 = vector.broadcast %cst_60 : f32 to vector<16x32xf32>
    %119 = arith.addf %118, %117 : vector<16x32xf32>
    %120 = arith.divf %118, %119 : vector<16x32xf32>
    %c0_61 = arith.constant 0 : index
    %c0_62 = arith.constant 0 : index
    %121 = vector.load %arg8[%c0_61, %c0_62] : memref<64x256xf32, #tpu.memory_space<vmem>>, vector<32x256xf32>
    %cst_63 = arith.constant dense<0.000000e+00> : vector<16x256xf32>
    %122 = tpu.matmul %120, %121, %cst_63 {dimension_numbers = #tpu.dot_dimension_numbers<[1], [0], [0], [1], [0, 0, 1, 1], [], []>} : vector<16x32xf32>, vector<32x256xf32>, vector<16x256xf32> -> vector<16x256xf32>
    %c32_64 = arith.constant 32 : index
    %c0_65 = arith.constant 0 : index
    %123 = vector.load %arg8[%c32_64, %c0_65] : memref<64x256xf32, #tpu.memory_space<vmem>>, vector<32x256xf32>
    %cst_66 = arith.constant dense<0.000000e+00> : vector<16x256xf32>
    %124 = tpu.matmul %120, %123, %cst_66 {dimension_numbers = #tpu.dot_dimension_numbers<[1], [0], [0], [1], [0, 0, 1, 1], [], []>} : vector<16x32xf32>, vector<32x256xf32>, vector<16x256xf32> -> vector<16x256xf32>
    %125 = arith.mulf %108, %122 : vector<16x256xf32>
    %126 = arith.mulf %125, %124 : vector<16x256xf32>
    %cst_67 = arith.constant dense<0.000000e+00> : vector<16xf32>
    %127 = vector.multi_reduction <add>, %126, %cst_67 [1] : vector<16x256xf32> to vector<16xf32>
    %128 = vector.shape_cast %127 : vector<16xf32> to vector<16x1xf32>
    %cst_68 = arith.constant 2.560000e+02 : f32
    %129 = vector.broadcast %cst_68 : f32 to vector<16x1xf32>
    %130 = arith.divf %128, %129 : vector<16x1xf32>
    %131 = vector.broadcast %130 : vector<16x1xf32> to vector<16x256xf32>
    %132 = arith.subf %126, %131 : vector<16x256xf32>
    %133 = arith.mulf %132, %132 : vector<16x256xf32>
    %cst_69 = arith.constant dense<0.000000e+00> : vector<16xf32>
    %134 = vector.multi_reduction <add>, %133, %cst_69 [1] : vector<16x256xf32> to vector<16xf32>
    %135 = vector.shape_cast %134 : vector<16xf32> to vector<16x1xf32>
    %cst_70 = arith.constant 2.560000e+02 : f32
    %136 = vector.broadcast %cst_70 : f32 to vector<16x1xf32>
    %137 = arith.divf %135, %136 : vector<16x1xf32>
    %cst_71 = arith.constant 9.99999974E-6 : f32
    %138 = vector.broadcast %cst_71 : f32 to vector<16x1xf32>
    %139 = arith.addf %137, %138 : vector<16x1xf32>
    %140 = math.rsqrt %139 : vector<16x1xf32>
    %141 = vector.broadcast %140 : vector<16x1xf32> to vector<16x256xf32>
    %142 = arith.mulf %132, %141 : vector<16x256xf32>
    %c96 = arith.constant 96 : index
    %c0_72 = arith.constant 0 : index
    %143 = vector.load %arg5[%c96, %c0_72] : memref<128x1xf32, #tpu.memory_space<vmem>>, vector<16x1xf32>
    %144 = vector.broadcast %143 : vector<16x1xf32> to vector<16x256xf32>
    %145 = arith.mulf %142, %144 : vector<16x256xf32>
    %c112 = arith.constant 112 : index
    %c0_73 = arith.constant 0 : index
    %146 = vector.load %arg5[%c112, %c0_73] : memref<128x1xf32, #tpu.memory_space<vmem>>, vector<16x1xf32>
    %147 = vector.broadcast %146 : vector<16x1xf32> to vector<16x256xf32>
    %148 = arith.addf %145, %147 : vector<16x256xf32>
    %c17_i32_74 = arith.constant 17 : i32
    %149 = tpu.dynamic_rotate %108 by %c17_i32_74 dim 1 : vector<16x256xf32>, i32 -> vector<16x256xf32>
    %c0_75 = arith.constant 0 : index
    %c0_76 = arith.constant 0 : index
    %150 = vector.load %arg6[%c0_75, %c0_76] : memref<9x256xf32, #tpu.memory_space<vmem>>, vector<1x256xf32>
    %151 = vector.broadcast %150 : vector<1x256xf32> to vector<16x256xf32>
    %152 = arith.mulf %149, %151 : vector<16x256xf32>
    %153 = arith.truncf %152 : vector<16x256xf32> to vector<16x256xbf16>
    %c16_i32_77 = arith.constant 16 : i32
    %154 = tpu.dynamic_rotate %108 by %c16_i32_77 dim 1 : vector<16x256xf32>, i32 -> vector<16x256xf32>
    %c1_78 = arith.constant 1 : index
    %c0_79 = arith.constant 0 : index
    %155 = vector.load %arg6[%c1_78, %c0_79] : memref<9x256xf32, #tpu.memory_space<vmem>>, vector<1x256xf32>
    %156 = vector.broadcast %155 : vector<1x256xf32> to vector<16x256xf32>
    %157 = arith.mulf %154, %156 : vector<16x256xf32>
    %158 = arith.truncf %157 : vector<16x256xf32> to vector<16x256xbf16>
    %c15_i32_80 = arith.constant 15 : i32
    %159 = tpu.dynamic_rotate %108 by %c15_i32_80 dim 1 : vector<16x256xf32>, i32 -> vector<16x256xf32>
    %c2_81 = arith.constant 2 : index
    %c0_82 = arith.constant 0 : index
    %160 = vector.load %arg6[%c2_81, %c0_82] : memref<9x256xf32, #tpu.memory_space<vmem>>, vector<1x256xf32>
    %161 = vector.broadcast %160 : vector<1x256xf32> to vector<16x256xf32>
    %162 = arith.mulf %159, %161 : vector<16x256xf32>
    %163 = arith.truncf %162 : vector<16x256xf32> to vector<16x256xbf16>
    %c1_i32_83 = arith.constant 1 : i32
    %164 = tpu.dynamic_rotate %108 by %c1_i32_83 dim 1 : vector<16x256xf32>, i32 -> vector<16x256xf32>
    %c3_84 = arith.constant 3 : index
    %c0_85 = arith.constant 0 : index
    %165 = vector.load %arg6[%c3_84, %c0_85] : memref<9x256xf32, #tpu.memory_space<vmem>>, vector<1x256xf32>
    %166 = vector.broadcast %165 : vector<1x256xf32> to vector<16x256xf32>
    %167 = arith.mulf %164, %166 : vector<16x256xf32>
    %168 = arith.truncf %167 : vector<16x256xf32> to vector<16x256xbf16>
    %169 = arith.truncf %108 : vector<16x256xf32> to vector<16x256xbf16>
    %c255_i32_86 = arith.constant 255 : i32
    %170 = tpu.dynamic_rotate %108 by %c255_i32_86 dim 1 : vector<16x256xf32>, i32 -> vector<16x256xf32>
    %c5_87 = arith.constant 5 : index
    %c0_88 = arith.constant 0 : index
    %171 = vector.load %arg6[%c5_87, %c0_88] : memref<9x256xf32, #tpu.memory_space<vmem>>, vector<1x256xf32>
    %172 = vector.broadcast %171 : vector<1x256xf32> to vector<16x256xf32>
    %173 = arith.mulf %170, %172 : vector<16x256xf32>
    %174 = arith.truncf %173 : vector<16x256xf32> to vector<16x256xbf16>
    %c241_i32_89 = arith.constant 241 : i32
    %175 = tpu.dynamic_rotate %108 by %c241_i32_89 dim 1 : vector<16x256xf32>, i32 -> vector<16x256xf32>
    %c6_90 = arith.constant 6 : index
    %c0_91 = arith.constant 0 : index
    %176 = vector.load %arg6[%c6_90, %c0_91] : memref<9x256xf32, #tpu.memory_space<vmem>>, vector<1x256xf32>
    %177 = vector.broadcast %176 : vector<1x256xf32> to vector<16x256xf32>
    %178 = arith.mulf %175, %177 : vector<16x256xf32>
    %179 = arith.truncf %178 : vector<16x256xf32> to vector<16x256xbf16>
    %c240_i32_92 = arith.constant 240 : i32
    %180 = tpu.dynamic_rotate %108 by %c240_i32_92 dim 1 : vector<16x256xf32>, i32 -> vector<16x256xf32>
    %c7_93 = arith.constant 7 : index
    %c0_94 = arith.constant 0 : index
    %181 = vector.load %arg6[%c7_93, %c0_94] : memref<9x256xf32, #tpu.memory_space<vmem>>, vector<1x256xf32>
    %182 = vector.broadcast %181 : vector<1x256xf32> to vector<16x256xf32>
    %183 = arith.mulf %180, %182 : vector<16x256xf32>
    %184 = arith.truncf %183 : vector<16x256xf32> to vector<16x256xbf16>
    %c239_i32_95 = arith.constant 239 : i32
    %185 = tpu.dynamic_rotate %108 by %c239_i32_95 dim 1 : vector<16x256xf32>, i32 -> vector<16x256xf32>
    %c8_96 = arith.constant 8 : index
    %c0_97 = arith.constant 0 : index
    %186 = vector.load %arg6[%c8_96, %c0_97] : memref<9x256xf32, #tpu.memory_space<vmem>>, vector<1x256xf32>
    %187 = vector.broadcast %186 : vector<1x256xf32> to vector<16x256xf32>
    %188 = arith.mulf %185, %187 : vector<16x256xf32>
    %189 = arith.truncf %188 : vector<16x256xf32> to vector<16x256xbf16>
    %190 = tpu.concatenate %153, %158, %163, %168, %169, %174, %179, %184, %189 in 0 : vector<16x256xbf16>, vector<16x256xbf16>, vector<16x256xbf16>, vector<16x256xbf16>, vector<16x256xbf16>, vector<16x256xbf16>, vector<16x256xbf16>, vector<16x256xbf16>, vector<16x256xbf16> -> vector<144x256xbf16>
    %c2_98 = arith.constant 2 : index
    %c0_99 = arith.constant 0 : index
    %c0_100 = arith.constant 0 : index
    %191 = vector.load %arg3[%c2_98, %c0_99, %c0_100] : memref<3x16x144xbf16, #tpu.memory_space<vmem>>, vector<1x16x144xbf16>
    %192 = vector.shape_cast %191 : vector<1x16x144xbf16> to vector<16x144xbf16>
    %cst_101 = arith.constant dense<0.000000e+00> : vector<16x256xf32>
    %193 = tpu.matmul %192, %190, %cst_101 {dimension_numbers = #tpu.dot_dimension_numbers<[1], [0], [0], [1], [0, 0, 1, 1], [], []>} : vector<16x144xbf16>, vector<144x256xbf16>, vector<16x256xf32> -> vector<16x256xf32>
    %c80 = arith.constant 80 : index
    %c0_102 = arith.constant 0 : index
    %194 = vector.load %arg5[%c80, %c0_102] : memref<128x1xf32, #tpu.memory_space<vmem>>, vector<16x1xf32>
    %195 = vector.broadcast %194 : vector<16x1xf32> to vector<16x256xf32>
    %196 = arith.addf %193, %195 : vector<16x256xf32>
    %c0_103 = arith.constant 0 : index
    %c0_104 = arith.constant 0 : index
    %197 = vector.load %arg11[%c0_103, %c0_104] : memref<16x16xf32, #tpu.memory_space<vmem>>, vector<16x16xf32>
    %cst_105 = arith.constant dense<0.000000e+00> : vector<16xf32>
    %198 = vector.multi_reduction <add>, %148, %cst_105 [1] : vector<16x256xf32> to vector<16xf32>
    %199 = vector.shape_cast %198 : vector<16xf32> to vector<16x1xf32>
    %cst_106 = arith.constant 2.560000e+02 : f32
    %200 = vector.broadcast %cst_106 : f32 to vector<16x1xf32>
    %201 = arith.divf %199, %200 : vector<16x1xf32>
    %cst_107 = arith.constant dense<0.000000e+00> : vector<16xf32>
    %202 = vector.multi_reduction <add>, %196, %cst_107 [1] : vector<16x256xf32> to vector<16xf32>
    %203 = vector.shape_cast %202 : vector<16xf32> to vector<16x1xf32>
    %cst_108 = arith.constant 2.560000e+02 : f32
    %204 = vector.broadcast %cst_108 : f32 to vector<16x1xf32>
    %205 = arith.divf %203, %204 : vector<16x1xf32>
    %cst_109 = arith.constant dense<0.000000e+00> : vector<16x1xf32>
    %206 = tpu.matmul %197, %201, %cst_109 {dimension_numbers = #tpu.dot_dimension_numbers<[1], [0], [0], [1], [0, 0, 1, 1], [], []>} : vector<16x16xf32>, vector<16x1xf32>, vector<16x1xf32> -> vector<16x1xf32>
    %cst_110 = arith.constant 5.000000e-01 : f32
    %207 = vector.broadcast %cst_110 : f32 to vector<16x1xf32>
    %208 = arith.mulf %206, %207 : vector<16x1xf32>
    %209 = arith.subf %201, %208 : vector<16x1xf32>
    %210 = math.exp %209 : vector<16x1xf32>
    %cst_111 = arith.constant dense<0.000000e+00> : vector<16x1xf32>
    %211 = tpu.matmul %197, %210, %cst_111 {dimension_numbers = #tpu.dot_dimension_numbers<[1], [0], [0], [1], [0, 0, 1, 1], [], []>} : vector<16x16xf32>, vector<16x1xf32>, vector<16x1xf32> -> vector<16x1xf32>
    %212 = arith.divf %210, %211 : vector<16x1xf32>
    %cst_112 = arith.constant dense<0.000000e+00> : vector<16x1xf32>
    %213 = tpu.matmul %197, %205, %cst_112 {dimension_numbers = #tpu.dot_dimension_numbers<[1], [0], [0], [1], [0, 0, 1, 1], [], []>} : vector<16x16xf32>, vector<16x1xf32>, vector<16x1xf32> -> vector<16x1xf32>
    %cst_113 = arith.constant 5.000000e-01 : f32
    %214 = vector.broadcast %cst_113 : f32 to vector<16x1xf32>
    %215 = arith.mulf %213, %214 : vector<16x1xf32>
    %216 = arith.subf %205, %215 : vector<16x1xf32>
    %217 = math.exp %216 : vector<16x1xf32>
    %cst_114 = arith.constant dense<0.000000e+00> : vector<16x1xf32>
    %218 = tpu.matmul %197, %217, %cst_114 {dimension_numbers = #tpu.dot_dimension_numbers<[1], [0], [0], [1], [0, 0, 1, 1], [], []>} : vector<16x16xf32>, vector<16x1xf32>, vector<16x1xf32> -> vector<16x1xf32>
    %219 = arith.divf %217, %218 : vector<16x1xf32>
    %220 = vector.broadcast %212 : vector<16x1xf32> to vector<16x256xf32>
    %221 = arith.mulf %220, %196 : vector<16x256xf32>
    %222 = vector.broadcast %219 : vector<16x1xf32> to vector<16x256xf32>
    %223 = arith.mulf %222, %148 : vector<16x256xf32>
    %224 = arith.addf %221, %223 : vector<16x256xf32>
    %cst_115 = arith.constant dense<0.000000e+00> : vector<16x256xf32>
    %225 = tpu.matmul %197, %224, %cst_115 {dimension_numbers = #tpu.dot_dimension_numbers<[1], [0], [0], [1], [0, 0, 1, 1], [], []>} : vector<16x16xf32>, vector<16x256xf32>, vector<16x256xf32> -> vector<16x256xf32>
    %226 = arith.negf %225 : vector<16x256xf32>
    %227 = math.exp %226 : vector<16x256xf32>
    %cst_116 = arith.constant 1.000000e+00 : f32
    %228 = vector.broadcast %cst_116 : f32 to vector<16x256xf32>
    %229 = arith.addf %228, %227 : vector<16x256xf32>
    %230 = arith.divf %228, %229 : vector<16x256xf32>
    %231 = arith.mulf %108, %230 : vector<16x256xf32>
    %c0_117 = arith.constant 0 : index
    %c0_118 = arith.constant 0 : index
    %232 = vector.load %arg13[%c0_117, %c0_118] : memref<16x256xf32, #tpu.memory_space<vmem>>, vector<16x256xf32>
    %233 = arith.addf %232, %231 : vector<16x256xf32>
    %cst_119 = arith.constant 0.000000e+00 : f32
    %234 = vector.broadcast %cst_119 : f32 to vector<16x256xf32>
    %235 = arith.maximumf %233, %234 : vector<16x256xf32>
    %c0_120 = arith.constant 0 : index
    %c0_121 = arith.constant 0 : index
    %c0_122 = arith.constant 0 : index
    %236 = vector.load %arg12[%c0_120, %c0_121, %c0_122] : memref<1x16x256xf32, #tpu.memory_space<vmem>>, vector<1x16x256xf32>
    %237 = vector.shape_cast %236 : vector<1x16x256xf32> to vector<16x256xf32>
    %238 = vector.shape_cast %235 : vector<16x256xf32> to vector<1x16x256xf32>
    tpu.vector_store %arg12[%c0_120, %c0_121, %c0_122], %238 {strides = array<i32>} : memref<1x16x256xf32, #tpu.memory_space<vmem>>, vector<1x16x256xf32>,
    return
  }
  func.func @transform_0(%arg0: i32) -> (i32, i32, i32) {
    %c0_i32 = arith.constant 0 : i32
    %c0_i32_0 = arith.constant 0 : i32
    %c0_i32_1 = arith.constant 0 : i32
    return %arg0, %c0_i32, %c0_i32_0 : i32, i32, i32
  }
  func.func @transform_1(%arg0: i32) -> (i32, i32) {
    %c0_i32 = arith.constant 0 : i32
    %c0_i32_0 = arith.constant 0 : i32
    %c0_i32_1 = arith.constant 0 : i32
    return %c0_i32, %c0_i32_0 : i32, i32
  }
  func.func @transform_2(%arg0: i32) -> (i32, i32, i32) {
    %c0_i32 = arith.constant 0 : i32
    %c0_i32_0 = arith.constant 0 : i32
    %c0_i32_1 = arith.constant 0 : i32
    %c0_i32_2 = arith.constant 0 : i32
    return %c0_i32, %c0_i32_0, %c0_i32_1 : i32, i32, i32
  }
  func.func @transform_3(%arg0: i32) -> (i32, i32) {
    %c0_i32 = arith.constant 0 : i32
    %c0_i32_0 = arith.constant 0 : i32
    %c0_i32_1 = arith.constant 0 : i32
    return %c0_i32, %c0_i32_0 : i32, i32
  }
  func.func @transform_4(%arg0: i32) -> (i32, i32) {
    %c0_i32 = arith.constant 0 : i32
    %c0_i32_0 = arith.constant 0 : i32
    %c0_i32_1 = arith.constant 0 : i32
    return %c0_i32, %c0_i32_0 : i32, i32
  }
  func.func @transform_5(%arg0: i32) -> (i32, i32) {
    %c0_i32 = arith.constant 0 : i32
    %c0_i32_0 = arith.constant 0 : i32
    %c0_i32_1 = arith.constant 0 : i32
    return %c0_i32, %c0_i32_0 : i32, i32
  }
  func.func @transform_6(%arg0: i32) -> (i32, i32) {
    %c0_i32 = arith.constant 0 : i32
    %c0_i32_0 = arith.constant 0 : i32
    %c0_i32_1 = arith.constant 0 : i32
    return %c0_i32, %c0_i32_0 : i32, i32
  }
  func.func @transform_7(%arg0: i32) -> (i32, i32) {
    %c0_i32 = arith.constant 0 : i32
    %c0_i32_0 = arith.constant 0 : i32
    %c0_i32_1 = arith.constant 0 : i32
    return %c0_i32, %c0_i32_0 : i32, i32
  }
  func.func @transform_8(%arg0: i32) -> (i32, i32) {
    %c0_i32 = arith.constant 0 : i32
    %c0_i32_0 = arith.constant 0 : i32
    %c0_i32_1 = arith.constant 0 : i32
    return %c0_i32, %c0_i32_0 : i32, i32
  }
  func.func @transform_9(%arg0: i32) -> (i32, i32) {
    %c0_i32 = arith.constant 0 : i32
    %c0_i32_0 = arith.constant 0 : i32
    %c0_i32_1 = arith.constant 0 : i32
    return %c0_i32, %c0_i32_0 : i32, i32
  }
  func.func @transform_10(%arg0: i32) -> (i32, i32) {
    %c0_i32 = arith.constant 0 : i32
    %c0_i32_0 = arith.constant 0 : i32
    %c0_i32_1 = arith.constant 0 : i32
    return %c0_i32, %c0_i32_0 : i32, i32
  }
  func.func @transform_11(%arg0: i32) -> (i32, i32, i32) {
    %c0_i32 = arith.constant 0 : i32
    %c0_i32_0 = arith.constant 0 : i32
    %c0_i32_1 = arith.constant 0 : i32
    return %arg0, %c0_i32, %c0_i32_0 : i32, i32, i32
  }
}

</mosaic_0001>

<llo_original>
// kernel: mul.4
$region0: #{mul.4}
  %s0 = inlined_call_operand.vmem [shape: f32[3,3,2,2], index: 0, kind: input, shape index: {}]
  %s1 = inlined_call_operand.vmem [shape: f32[9,2,2], index: 1, kind: output, shape index: {}]
  $region1: #{mul.4} parent=0
    #allocation0 [shape = 'u8[8192]{0}', space=vmem, size = 0x2000, scoped, tag = 'scoped mem for output reshape']
    #allocation1 [shape = 'u8[16384]{0}', space=vmem, size = 0x4000, scoped, tag = 'scoped mem for input reshape']
    %s3 = ssub.s32 16, 1
    %s4 = scalar_lea.vmem %s0, 12
    %v5 = vld [vmem:[%s4] sm:%s3]
    %s6 = scalar_lea.vmem [#allocation1], 24
    %7 = vst [vmem:[%s6] sm:%s3] %v5
    %s8 = scalar_lea.vmem %s0, 8
    %v9 = vld [vmem:[%s8] sm:%s3]
    %s10 = scalar_lea.vmem [#allocation1], 16
    %11 = vst [vmem:[%s10] sm:%s3] %v9
    %s12 = scalar_lea.vmem %s0, 4
    %v13 = vld [vmem:[%s12] sm:%s3]
    %s14 = scalar_lea.vmem [#allocation1], 8
    %15 = vst [vmem:[%s14] sm:%s3] %v13
    %v16 = vld [vmem:[%s0] sm:%s3]
    %17 = vst [vmem:[#allocation1] sm:%s3] %v16
    %v18 = vld [vmem:[#allocation1] ss:$8 sm:$0xf]
    %vm19 = vcmask 23552
    %20 = vst.msk [vmem:[#allocation0] sm:$0x3] %vm19, %v18
    %s21 = scalar_lea.vmem [#allocation0], 6
    %22 = vst.msk [vmem:[%s21] sm:$0xc] %vm19, %v18
    %s23 = scalar_lea.vmem [#allocation1], 2
    %v24 = vld [vmem:[%s23] ss:$8 sm:$0xf]
    %25 = vrot.lane.b32.xlu0 %v24, 6
    %v26 = vpop.permute.xlu0 %25
    %vm27 = vcmask 72752
    %28 = vst.msk [vmem:[#allocation0] sm:$0x3] %vm27, %v26
    %s29 = scalar_lea.vmem [#allocation0], 6
    %30 = vst.msk [vmem:[%s29] sm:$0xc] %vm27, %v26
    %s31 = scalar_lea.vmem [#allocation1], 1
    %v32 = vld [vmem:[%s31] ss:$8 sm:$0xf]
    %33 = vrot.lane.b32.xlu0 %v32, 3
    %v34 = vpop.permute.xlu0 %33
    %vm35 = vcmask 48152
    %36 = vst.msk [vmem:[#allocation0] sm:$0x3] %vm35, %v34
    %s37 = scalar_lea.vmem [#allocation0], 6
    %38 = vst.msk [vmem:[%s37] sm:$0xc] %vm35, %v34
    %s40 = ssub.s32 4, 1
    %v41 = vld [vmem:[#allocation0] sm:%s40]
    %s43 = ssub.s32 4, 1
    %44 = vst [vmem:[%s1] sm:%s43] %v41
    %s45 = scalar_lea.vmem [#allocation0], 8
    %v46 = vld [vmem:[%s45] sm:%s40]
    %s48 = ssub.s32 4, 1
    %s49 = scalar_lea.vmem %s1, 2
    %50 = vst [vmem:[%s49] sm:%s48] %v46

// kernel: mul.78
$region0: #{mul.78}
  #allocation0 [shape = 's32[1]{0}', space=sflag, size = 0x4, scoped, tag = 'scoped memory for mul.78']
  %s0 = inlined_call_operand.vmem [shape: f32[16,16], index: 0, kind: input, shape index: {}]
  %s1 = inlined_call_operand.vmem [shape: f32[16,16], index: 1, kind: input, shape index: {}]
  %s2 = inlined_call_operand.vmem [shape: f32[16,16], index: 2, kind: output, shape index: {}]
  %v3 = vld [vmem:[%s0] sm:$0xff]
  %v4 = vld [vmem:[%s1] sm:$0xff]
  %5 = xla_tuple %v3, %v4
  %6 = xla_tuple %5
  %v7 = vmul.f32 %v3, %v4
  %8 = xla_tuple %v7
  %9 = vst [vmem:[%s2] sm:$0xff] %v7
  %s10 = scalar_lea.vmem %s0, 8
  %v11 = vld [vmem:[%s10] sm:$0xff]
  %s12 = scalar_lea.vmem %s1, 8
  %v13 = vld [vmem:[%s12] sm:$0xff]
  %14 = xla_tuple %v11, %v13
  %15 = xla_tuple %14
  %v16 = vmul.f32 %v11, %v13
  %17 = xla_tuple %v16
  %s18 = scalar_lea.vmem %s2, 8
  %19 = vst [vmem:[%s18] sm:$0xff] %v16

// kernel: tile.23
$region0: #{tile.23}
  #allocation0 [shape = 's32[1]{0}', space=sflag, size = 0x4, scoped, tag = 'scoped memory for tile.23']
  %s0 = inlined_call_operand.vmem [shape: f32[2], index: 0, kind: input, shape index: {}]
  %s1 = inlined_call_operand.vmem [shape: f32[8,2], index: 1, kind: output, shape index: {}]
  // Predicated region
  $region2: #{tile.23} parent=0 // pred_check
    _
  $region3: #{tile.23} parent=0 // pred_check_branch
    %3 = sbr.rel (0) target = $region5
  $region4: #{tile.23} parent=0 // pred_region
    _
  $region5: #{tile.23} parent=0 // pred_fallthru
    _
  %v4 = vld [vmem:[%s0] ss:$0 sm:$0xff]
  %5 = vst [vmem:[%s1] sm:$0xff] %v4

// kernel: tile.24
$region0: #{tile.24}
  %s0 = inlined_call_operand.vmem [shape: f32[8,2], index: 0, kind: input, shape index: {}]
  %s1 = inlined_call_operand.vmem [shape: f32[16], index: 1, kind: output, shape index: {}]
  $region1: #{tile.24} parent=0
    #allocation0 [shape = 'u8[4096]{0}', space=vmem, size = 0x1000, scoped, tag = 'scoped mem for output reshape']
    %v2 = vld [vmem:[%s0] sm:$0x1]
    %vm3 = vcmask 15360
    %4 = vst.msk [vmem:[#allocation0] sm:$0x1] %vm3, %v2
    %s5 = scalar_lea.vmem %s0, 7
    %v6 = vld [vmem:[%s5] sm:$0x1]
    %7 = vrot.lane.b32.xlu0 %v6, 14
    %v8 = vpop.permute.xlu0 %7
    %vm9 = vcmask 130160
    %10 = vst.msk [vmem:[#allocation0] sm:$0x1] %vm9, %v8
    %s11 = scalar_lea.vmem %s0, 6
    %v12 = vld [vmem:[%s11] sm:$0x1]
    %13 = vrot.lane.b32.xlu0 %v12, 12
    %v14 = vpop.permute.xlu0 %13
    %vm15 = vcmask 113760
    %16 = vst.msk [vmem:[#allocation0] sm:$0x1] %vm15, %v14
    %s17 = scalar_lea.vmem %s0, 5
    %v18 = vld [vmem:[%s17] sm:$0x1]
    %19 = vrot.lane.b32.xlu0 %v18, 10
    %v20 = vpop.permute.xlu0 %19
    %vm21 = vcmask 97360
    %22 = vst.msk [vmem:[#allocation0] sm:$0x1] %vm21, %v20
    %s23 = scalar_lea.vmem %s0, 4
    %v24 = vld [vmem:[%s23] sm:$0x1]
    %25 = vrot.lane.b32.xlu0 %v24, 8
    %v26 = vpop.permute.xlu0 %25
    %vm27 = vcmask 80960
    %28 = vst.msk [vmem:[#allocation0] sm:$0x1] %vm27, %v26
    %s29 = scalar_lea.vmem %s0, 3
    %v30 = vld [vmem:[%s29] sm:$0x1]
    %31 = vrot.lane.b32.xlu0 %v30, 6
    %v32 = vpop.permute.xlu0 %31
    %vm33 = vcmask 64560
    %34 = vst.msk [vmem:[#allocation0] sm:$0x1] %vm33, %v32
    %s35 = scalar_lea.vmem %s0, 2
    %v36 = vld [vmem:[%s35] sm:$0x1]
    %37 = vrot.lane.b32.xlu0 %v36, 4
    %v38 = vpop.permute.xlu0 %37
    %vm39 = vcmask 48160
    %40 = vst.msk [vmem:[#allocation0] sm:$0x1] %vm39, %v38
    %s41 = scalar_lea.vmem %s0, 1
    %v42 = vld [vmem:[%s41] sm:$0x1]
    %43 = vrot.lane.b32.xlu0 %v42, 2
    %v44 = vpop.permute.xlu0 %43
    %vm45 = vcmask 31760
    %46 = vst.msk [vmem:[#allocation0] sm:$0x1] %vm45, %v44
    %s48 = ssub.s32 2, 1
    %v49 = vld [vmem:[#allocation0] sm:%s48]
    %s51 = ssub.s32 2, 1
    %52 = vst [vmem:[%s1] sm:%s51] %v49

// kernel: eeb_forward.1
$region0: #{eeb_forward.1}
  #allocation0 [shape = 'u32[]', space=smem, size = 0x4, offset = 0x4, fixed_abs, tag = 'smem constant byte address 0x4 - core index']
  #allocation1 [shape = 'u32[72,128]{1,0:T(1,128)}', space=vmem, size = 0x9000, scoped, tag = 'internal scratch']
  #allocation2 [shape = 'f32[16,256]{1,0:T(8,128)}', space=vmem, size = 0x4000, scoped, tag = 'scratch operand']
  %s0 = inlined_call_operand.vmem [shape: f32[2,4,256], index: 0, kind: input, shape index: {}]
  %s1 = inlined_call_operand.vmem [shape: f32[16,4], index: 1, kind: input, shape index: {}]
  %s2 = inlined_call_operand.vmem [shape: bf16[3,16,144], index: 2, kind: input, shape index: {}]
  %s3 = inlined_call_operand.vmem [shape: f32[16,16], index: 3, kind: input, shape index: {}]
  %s4 = inlined_call_operand.vmem [shape: f32[128,1], index: 4, kind: input, shape index: {}]
  %s5 = inlined_call_operand.vmem [shape: f32[9,256], index: 5, kind: input, shape index: {}]
  %s6 = inlined_call_operand.vmem [shape: f32[256,32], index: 6, kind: input, shape index: {}]
  %s7 = inlined_call_operand.vmem [shape: f32[64,256], index: 7, kind: input, shape index: {}]
  %s8 = inlined_call_operand.vmem [shape: f32[256,1], index: 8, kind: input, shape index: {}]
  %s9 = inlined_call_operand.vmem [shape: f32[1,256], index: 9, kind: input, shape index: {}]
  %s10 = inlined_call_operand.vmem [shape: f32[16,16], index: 10, kind: input, shape index: {}]
  %s11 = inlined_call_operand.vmem [shape: f32[2,16,256], index: 11, kind: output, shape index: {}]
  %s12 = sld [smem:[#allocation0]]
  $region77: #{eeb_forward.1} parent=0
    _
  %s14 = ssub.s32 1, %s12
  %s15 = scalar_select 0, %s14, %s12
  loop: start=0, step=1, limit=4
  $region2: #{eeb_forward.1} parent=0 // loop_pre_header
    _
  $region3: #{eeb_forward.1} parent=0 // loop_header
    %s17 = sphi 0, %s21
    %p18 = scmp.ge.s32.totalorder %s17, 4
    %s27 = sphi 0, %s29
    %s30 = sphi 0, %s27
    %s31 = sphi 0, %s30
    %s47 = sphi 0, %s31
    %s51 = sphi 0, %s51
    %s53 = sphi 0, %s51
    %s54 = sphi 0, %s53
    %s68 = sphi 0, %s54
    %s72 = sphi 0, %s72
    %s74 = sphi 0, %s72
    %s75 = sphi 0, %s74
    %s89 = sphi 0, %s75
    %s93 = sphi 0, %s93
    %s95 = sphi 0, %s93
    %s96 = sphi 0, %s95
    %s110 = sphi 0, %s96
    %s114 = sphi 0, %s114
    %s116 = sphi 0, %s114
    %s117 = sphi 0, %s116
    %s131 = sphi 0, %s117
    %s135 = sphi 0, %s135
    %s137 = sphi 0, %s135
    %s138 = sphi 0, %s137
    %s152 = sphi 0, %s138
    %s156 = sphi 0, %s156
    %s158 = sphi 0, %s156
    %s159 = sphi 0, %s158
    %s173 = sphi 0, %s159
    %s177 = sphi 0, %s177
    %s179 = sphi 0, %s177
    %s180 = sphi 0, %s179
    %s194 = sphi 0, %s180
    %s198 = sphi 0, %s198
    %s200 = sphi 0, %s198
    %s201 = sphi 0, %s200
    %s215 = sphi 0, %s201
    %s219 = sphi 0, %s219
    %s221 = sphi 0, %s219
    %s222 = sphi 0, %s221
    %s236 = sphi 0, %s222
    %s240 = sphi 0, %s240
    %s242 = sphi 0, %s240
    %s243 = sphi 0, %s242
    %s257 = sphi 0, %s243
    %s263 = sphi 0, %s265
    %s266 = sphi 0, %s263
    %s267 = sphi 0, %s266
    %s283 = sphi 0, %s267
  $region4: #{eeb_forward.1} parent=0 // loop_header_branch
    %20 = sbr.rel (%p18) target = $region8
  $region5: #{eeb_forward.1} parent=0 // loop_body
    %s22 = ssub.s32 %s17, 1
    %s23 = ssub.s32 %s17, 2
    %s24 = sadd.s32 %s17, 1
    %s25 = ssub.s32 %s17, %s24
    %p26 = scmp.eq.s32.totalorder %s25, 0
    %s28 = sadd.s32 %s27, 1
    %s29 = scalar_select %p26, %s27, %s28
    %p32 = pneg %p26
    %p33 = scmp.eq.s32.totalorder %s17, 1
    %p34 = por %p32, %p33
    %p35 = scmp.ne.s32.totalorder %s27, %s30
    %p36 = scmp.eq.s32.totalorder %s17, 0
    %p37 = por %p35, %p36
    %p38 = scmp.ne.s32.totalorder %s27, %s30
    %p39 = scmp.eq.s32.totalorder %s22, 1
    %p40 = por %p38, %p39
    %p41 = scmp.ne.s32.totalorder %s30, %s31
    %p42 = scmp.eq.s32.totalorder %s22, 0
    %p43 = por %p41, %p42
    %p44 = scmp.ne.s32.totalorder %s30, %s31
    %p45 = scmp.eq.s32.totalorder %s23, 1
    %p46 = por %p44, %p45
    %p48 = scmp.ne.s32.totalorder %s31, %s47
    %p49 = scmp.eq.s32.totalorder %s23, 0
    %p50 = por %p48, %p49
    %s52 = sadd.s32 %s51, 1
    %p55 = scmp.eq.s32.totalorder %s17, 1
    %p56 = scmp.ne.s32.totalorder %s51, %s53
    %p57 = scmp.eq.s32.totalorder %s17, 0
    %p58 = por %p56, %p57
    %p59 = scmp.ne.s32.totalorder %s51, %s53
    %p60 = scmp.eq.s32.totalorder %s22, 1
    %p61 = por %p59, %p60
    %p62 = scmp.ne.s32.totalorder %s53, %s54
    %p63 = scmp.eq.s32.totalorder %s22, 0
    %p64 = por %p62, %p63
    %p65 = scmp.ne.s32.totalorder %s53, %s54
    %p66 = scmp.eq.s32.totalorder %s23, 1
    %p67 = por %p65, %p66
    %p69 = scmp.ne.s32.totalorder %s54, %s68
    %p70 = scmp.eq.s32.totalorder %s23, 0
    %p71 = por %p69, %p70
    %s73 = sadd.s32 %s72, 1
    %p76 = scmp.eq.s32.totalorder %s17, 1
    %p77 = scmp.ne.s32.totalorder %s72, %s74
    %p78 = scmp.eq.s32.totalorder %s17, 0
    %p79 = por %p77, %p78
    %p80 = scmp.ne.s32.totalorder %s72, %s74
    %p81 = scmp.eq.s32.totalorder %s22, 1
    %p82 = por %p80, %p81
    %p83 = scmp.ne.s32.totalorder %s74, %s75
    %p84 = scmp.eq.s32.totalorder %s22, 0
    %p85 = por %p83, %p84
    %p86 = scmp.ne.s32.totalorder %s74, %s75
    %p87 = scmp.eq.s32.totalorder %s23, 1
    %p88 = por %p86, %p87
    %p90 = scmp.ne.s32.totalorder %s75, %s89
    %p91 = scmp.eq.s32.totalorder %s23, 0
    %p92 = por %p90, %p91
    %s94 = sadd.s32 %s93, 1
    %p97 = scmp.eq.s32.totalorder %s17, 1
    %p98 = scmp.ne.s32.totalorder %s93, %s95
    %p99 = scmp.eq.s32.totalorder %s17, 0
    %p100 = por %p98, %p99
    %p101 = scmp.ne.s32.totalorder %s93, %s95
    %p102 = scmp.eq.s32.totalorder %s22, 1
    %p103 = por %p101, %p102
    %p104 = scmp.ne.s32.totalorder %s95, %s96
    %p105 = scmp.eq.s32.totalorder %s22, 0
    %p106 = por %p104, %p105
    %p107 = scmp.ne.s32.totalorder %s95, %s96
    %p108 = scmp.eq.s32.totalorder %s23, 1
    %p109 = por %p107, %p108
    %p111 = scmp.ne.s32.totalorder %s96, %s110
    %p112 = scmp.eq.s32.totalorder %s23, 0
    %p113 = por %p111, %p112
    %s115 = sadd.s32 %s114, 1
    %p118 = scmp.eq.s32.totalorder %s17, 1
    %p119 = scmp.ne.s32.totalorder %s114, %s116
    %p120 = scmp.eq.s32.totalorder %s17, 0
    %p121 = por %p119, %p120
    %p122 = scmp.ne.s32.totalorder %s114, %s116
    %p123 = scmp.eq.s32.totalorder %s22, 1
    %p124 = por %p122, %p123
    %p125 = scmp.ne.s32.totalorder %s116, %s117
    %p126 = scmp.eq.s32.totalorder %s22, 0
    %p127 = por %p125, %p126
    %p128 = scmp.ne.s32.totalorder %s116, %s117
    %p129 = scmp.eq.s32.totalorder %s23, 1
    %p130 = por %p128, %p129
    %p132 = scmp.ne.s32.totalorder %s117, %s131
    %p133 = scmp.eq.s32.totalorder %s23, 0
    %p134 = por %p132, %p133
    %s136 = sadd.s32 %s135, 1
    %p139 = scmp.eq.s32.totalorder %s17, 1
    %p140 = scmp.ne.s32.totalorder %s135, %s137
    %p141 = scmp.eq.s32.totalorder %s17, 0
    %p142 = por %p140, %p141
    %p143 = scmp.ne.s32.totalorder %s135, %s137
    %p144 = scmp.eq.s32.totalorder %s22, 1
    %p145 = por %p143, %p144
    %p146 = scmp.ne.s32.totalorder %s137, %s138
    %p147 = scmp.eq.s32.totalorder %s22, 0
    %p148 = por %p146, %p147
    %p149 = scmp.ne.s32.totalorder %s137, %s138
    %p150 = scmp.eq.s32.totalorder %s23, 1
    %p151 = por %p149, %p150
    %p153 = scmp.ne.s32.totalorder %s138, %s152
    %p154 = scmp.eq.s32.totalorder %s23, 0
    %p155 = por %p153, %p154
    %s157 = sadd.s32 %s156, 1
    %p160 = scmp.eq.s32.totalorder %s17, 1
    %p161 = scmp.ne.s32.totalorder %s156, %s158
    %p162 = scmp.eq.s32.totalorder %s17, 0
    %p163 = por %p161, %p162
    %p164 = scmp.ne.s32.totalorder %s156, %s158
    %p165 = scmp.eq.s32.totalorder %s22, 1
    %p166 = por %p164, %p165
    %p167 = scmp.ne.s32.totalorder %s158, %s159
    %p168 = scmp.eq.s32.totalorder %s22, 0
    %p169 = por %p167, %p168
    %p170 = scmp.ne.s32.totalorder %s158, %s159
    %p171 = scmp.eq.s32.totalorder %s23, 1
    %p172 = por %p170, %p171
    %p174 = scmp.ne.s32.totalorder %s159, %s173
    %p175 = scmp.eq.s32.totalorder %s23, 0
    %p176 = por %p174, %p175
    %s178 = sadd.s32 %s177, 1
    %p181 = scmp.eq.s32.totalorder %s17, 1
    %p182 = scmp.ne.s32.totalorder %s177, %s179
    %p183 = scmp.eq.s32.totalorder %s17, 0
    %p184 = por %p182, %p183
    %p185 = scmp.ne.s32.totalorder %s177, %s179
    %p186 = scmp.eq.s32.totalorder %s22, 1
    %p187 = por %p185, %p186
    %p188 = scmp.ne.s32.totalorder %s179, %s180
    %p189 = scmp.eq.s32.totalorder %s22, 0
    %p190 = por %p188, %p189
    %p191 = scmp.ne.s32.totalorder %s179, %s180
    %p192 = scmp.eq.s32.totalorder %s23, 1
    %p193 = por %p191, %p192
    %p195 = scmp.ne.s32.totalorder %s180, %s194
    %p196 = scmp.eq.s32.totalorder %s23, 0
    %p197 = por %p195, %p196
    %s199 = sadd.s32 %s198, 1
    %p202 = scmp.eq.s32.totalorder %s17, 1
    %p203 = scmp.ne.s32.totalorder %s198, %s200
    %p204 = scmp.eq.s32.totalorder %s17, 0
    %p205 = por %p203, %p204
    %p206 = scmp.ne.s32.totalorder %s198, %s200
    %p207 = scmp.eq.s32.totalorder %s22, 1
    %p208 = por %p206, %p207
    %p209 = scmp.ne.s32.totalorder %s200, %s201
    %p210 = scmp.eq.s32.totalorder %s22, 0
    %p211 = por %p209, %p210
    %p212 = scmp.ne.s32.totalorder %s200, %s201
    %p213 = scmp.eq.s32.totalorder %s23, 1
    %p214 = por %p212, %p213
    %p216 = scmp.ne.s32.totalorder %s201, %s215
    %p217 = scmp.eq.s32.totalorder %s23, 0
    %p218 = por %p216, %p217
    %s220 = sadd.s32 %s219, 1
    %p223 = scmp.eq.s32.totalorder %s17, 1
    %p224 = scmp.ne.s32.totalorder %s219, %s221
    %p225 = scmp.eq.s32.totalorder %s17, 0
    %p226 = por %p224, %p225
    %p227 = scmp.ne.s32.totalorder %s219, %s221
    %p228 = scmp.eq.s32.totalorder %s22, 1
    %p229 = por %p227, %p228
    %p230 = scmp.ne.s32.totalorder %s221, %s222
    %p231 = scmp.eq.s32.totalorder %s22, 0
    %p232 = por %p230, %p231
    %p233 = scmp.ne.s32.totalorder %s221, %s222
    %p234 = scmp.eq.s32.totalorder %s23, 1
    %p235 = por %p233, %p234
    %p237 = scmp.ne.s32.totalorder %s222, %s236
    %p238 = scmp.eq.s32.totalorder %s23, 0
    %p239 = por %p237, %p238
    %s241 = sadd.s32 %s240, 1
    %p244 = scmp.eq.s32.totalorder %s17, 1
    %p245 = scmp.ne.s32.totalorder %s240, %s242
    %p246 = scmp.eq.s32.totalorder %s17, 0
    %p247 = por %p245, %p246
    %p248 = scmp.ne.s32.totalorder %s240, %s242
    %p249 = scmp.eq.s32.totalorder %s22, 1
    %p250 = por %p248, %p249
    %p251 = scmp.ne.s32.totalorder %s242, %s243
    %p252 = scmp.eq.s32.totalorder %s22, 0
    %p253 = por %p251, %p252
    %p254 = scmp.ne.s32.totalorder %s242, %s243
    %p255 = scmp.eq.s32.totalorder %s23, 1
    %p256 = por %p254, %p255
    %p258 = scmp.ne.s32.totalorder %s243, %s257
    %p259 = scmp.eq.s32.totalorder %s23, 0
    %p260 = por %p258, %p259
    %s261 = ssub.s32 %s17, %s24
    %p262 = scmp.eq.s32.totalorder %s261, 0
    %s264 = sadd.s32 %s263, 1
    %s265 = scalar_select %p262, %s263, %s264
    %p268 = pneg %p262
    %p269 = scmp.eq.s32.totalorder %s17, 1
    %p270 = por %p268, %p269
    %p271 = scmp.ne.s32.totalorder %s263, %s266
    %p272 = scmp.eq.s32.totalorder %s17, 0
    %p273 = por %p271, %p272
    %p274 = scmp.ne.s32.totalorder %s263, %s266
    %p275 = scmp.eq.s32.totalorder %s22, 1
    %p276 = por %p274, %p275
    %p277 = scmp.ne.s32.totalorder %s266, %s267
    %p278 = scmp.eq.s32.totalorder %s22, 0
    %p279 = por %p277, %p278
    %p280 = scmp.ne.s32.totalorder %s266, %s267
    %p281 = scmp.eq.s32.totalorder %s23, 1
    %p282 = por %p280, %p281
    %p284 = scmp.ne.s32.totalorder %s267, %s283
    %p285 = scmp.eq.s32.totalorder %s23, 0
    %p286 = por %p284, %p285
    %p287 = scmp.le.s32.totalorder 1, %s17
    %p288 = scmp.lt.s32.totalorder %s17, 3
    %p289 = pnand %p287, %p288
    %p290 = pneg %p289
    // Predicated region
    $region9: #{eeb_forward.1} parent=5 // pred_check
      _
    $region10: #{eeb_forward.1} parent=5 // pred_check_branch
      %292 = sbr.rel (%p289) target = $region12
    $region11: #{eeb_forward.1} parent=5 // pred_region
      %s293 = ssub.s32 %s17, 1
      // Predicated region
      $region13: #{eeb_forward.1} parent=11 // pred_check
        %p294 = pneg %p64
      $region14: #{eeb_forward.1} parent=11 // pred_check_branch
        %296 = sbr.rel (%p294) target = $region16
      $region15: #{eeb_forward.1} parent=11 // pred_region
        _
      $region16: #{eeb_forward.1} parent=11 // pred_fallthru
        _
      // Predicated region
      $region17: #{eeb_forward.1} parent=11 // pred_check
        %p297 = pneg %p85
      $region18: #{eeb_forward.1} parent=11 // pred_check_branch
        %299 = sbr.rel (%p297) target = $region20
      $region19: #{eeb_forward.1} parent=11 // pred_region
        _
      $region20: #{eeb_forward.1} parent=11 // pred_fallthru
        _
      // Predicated region
      $region21: #{eeb_forward.1} parent=11 // pred_check
        %p300 = pneg %p106
      $region22: #{eeb_forward.1} parent=11 // pred_check_branch
        %302 = sbr.rel (%p300) target = $region24
      $region23: #{eeb_forward.1} parent=11 // pred_region
        _
      $region24: #{eeb_forward.1} parent=11 // pred_fallthru
        _
      // Predicated region
      $region25: #{eeb_forward.1} parent=11 // pred_check
        %p303 = pneg %p127
      $region26: #{eeb_forward.1} parent=11 // pred_check_branch
        %305 = sbr.rel (%p303) target = $region28
      $region27: #{eeb_forward.1} parent=11 // pred_region
        _
      $region28: #{eeb_forward.1} parent=11 // pred_fallthru
        _
      // Predicated region
      $region29: #{eeb_forward.1} parent=11 // pred_check
        %p306 = pneg %p148
      $region30: #{eeb_forward.1} parent=11 // pred_check_branch
        %308 = sbr.rel (%p306) target = $region32
      $region31: #{eeb_forward.1} parent=11 // pred_region
        _
      $region32: #{eeb_forward.1} parent=11 // pred_fallthru
        _
      // Predicated region
      $region33: #{eeb_forward.1} parent=11 // pred_check
        %p309 = pneg %p169
      $region34: #{eeb_forward.1} parent=11 // pred_check_branch
        %311 = sbr.rel (%p309) target = $region36
      $region35: #{eeb_forward.1} parent=11 // pred_region
        _
      $region36: #{eeb_forward.1} parent=11 // pred_fallthru
        _
      // Predicated region
      $region37: #{eeb_forward.1} parent=11 // pred_check
        %p312 = pneg %p190
      $region38: #{eeb_forward.1} parent=11 // pred_check_branch
        %314 = sbr.rel (%p312) target = $region40
      $region39: #{eeb_forward.1} parent=11 // pred_region
        _
      $region40: #{eeb_forward.1} parent=11 // pred_fallthru
        _
      // Predicated region
      $region41: #{eeb_forward.1} parent=11 // pred_check
        %p315 = pneg %p211
      $region42: #{eeb_forward.1} parent=11 // pred_check_branch
        %317 = sbr.rel (%p315) target = $region44
      $region43: #{eeb_forward.1} parent=11 // pred_region
        _
      $region44: #{eeb_forward.1} parent=11 // pred_fallthru
        _
      // Predicated region
      $region45: #{eeb_forward.1} parent=11 // pred_check
        %p318 = pneg %p232
      $region46: #{eeb_forward.1} parent=11 // pred_check_branch
        %320 = sbr.rel (%p318) target = $region48
      $region47: #{eeb_forward.1} parent=11 // pred_region
        _
      $region48: #{eeb_forward.1} parent=11 // pred_fallthru
        _
      // Predicated region
      $region49: #{eeb_forward.1} parent=11 // pred_check
        %p321 = pneg %p253
      $region50: #{eeb_forward.1} parent=11 // pred_check_branch
        %323 = sbr.rel (%p321) target = $region52
      $region51: #{eeb_forward.1} parent=11 // pred_region
        _
      $region52: #{eeb_forward.1} parent=11 // pred_fallthru
        _
    $region12: #{eeb_forward.1} parent=5 // pred_fallthru
      _
    %p324 = scmp.lt.s32.totalorder %s17, 2
    // Predicated region
    $region53: #{eeb_forward.1} parent=5 // pred_check
      %p325 = pneg %p324
    $region54: #{eeb_forward.1} parent=5 // pred_check_branch
      %327 = sbr.rel (%p325) target = $region56
    $region55: #{eeb_forward.1} parent=5 // pred_region
      // Predicated region
      $region57: #{eeb_forward.1} parent=55 // pred_check
        %p328 = pneg %p37
      $region58: #{eeb_forward.1} parent=55 // pred_check_branch
        %330 = sbr.rel (%p328) target = $region60
      $region59: #{eeb_forward.1} parent=55 // pred_region
        %p331 = scmp.lt.s32.totalorder %s17, 1
        %s332 = scalar_select %p331, %s17, 1
        %s333 = smul.addr %s332, 2
        %s334 = smul.addr %s333, 4
        %s335 = scalar_lea.vmem %s0, %s334
      $region60: #{eeb_forward.1} parent=55 // pred_fallthru
        _
    $region56: #{eeb_forward.1} parent=5 // pred_fallthru
      _
    %p336 = scmp.le.s32.totalorder 1, %s17
    %p337 = scmp.lt.s32.totalorder %s17, 3
    %p338 = pnand %p336, %p337
    %p339 = pneg %p338
    // Predicated region
    $region61: #{eeb_forward.1} parent=5 // pred_check
      _
    $region62: #{eeb_forward.1} parent=5 // pred_check_branch
      %341 = sbr.rel (%p338) target = $region64
    $region63: #{eeb_forward.1} parent=5 // pred_region
      %s342 = ssub.s32 %s17, 1
      %p343 = scmp.lt.s32.totalorder %s22, 1
      %s344 = scalar_select %p343, %s22, 1
      %s345 = smul.addr %s344, 2
      %s346 = smul.addr %s345, 4
      %s347 = scalar_lea.vmem %s0, %s346
      %p348 = pneg %p43
      %p349 = pneg %p40
      %p350 = pneg %p64
      %p351 = pneg %p61
      %p352 = pneg %p85
      %p353 = pneg %p82
      %p354 = pneg %p106
      %p355 = pneg %p103
      %p356 = pneg %p127
      %p357 = pneg %p124
      %p358 = pneg %p148
      %p359 = pneg %p145
      %p360 = pneg %p169
      %p361 = pneg %p166
      %p362 = pneg %p190
      %p363 = pneg %p187
      %p364 = pneg %p211
      %p365 = pneg %p208
      %p366 = pneg %p232
      %p367 = pneg %p229
      %p368 = pneg %p253
      %p369 = pneg %p250
      %p370 = pneg %p279
      %p371 = pneg %p276
      %p372 = scmp.lt.s32.totalorder %s22, 1
      %s373 = scalar_select %p372, %s22, 1
      %s374 = smul.addr %s373, 4
      %s375 = smul.addr %s374, 8
      %s376 = scalar_lea.vmem %s11, %s375
      %p377 = scmp.lt.s32.totalorder %s22, 1
      %s378 = scalar_select %p377, %s22, 1
      %s379 = smul.addr %s378, 2
      %s380 = smul.addr %s379, 4
      %s381 = scalar_lea.vmem %s0, %s380
      %p382 = scmp.lt.s32.totalorder %s22, 1
      %s383 = scalar_select %p382, %s22, 1
      %s384 = smul.addr %s383, 4
      %s385 = smul.addr %s384, 8
      %s386 = scalar_lea.vmem %s11, %s385
      %v388 = vld [vmem:[%s1] sm:$0xff]
      %v389 = vld [vmem:[%s1 + $0x8] sm:$0xff]
      %v390 = vld [vmem:[%s381] sm:$0xff]
      %v391 = vld [vmem:[%s4] sm:$0xff]
      %v392 = vld [vmem:[%s4 + $0x8] sm:$0xff]
      %394 = vset.pattern.permute.xlu0 0
      %395 = vperm.xlu0 %394, %v391
      %v396 = vpop.permute.xlu0 %395
      %399 = vset.pattern.permute.xlu0 0
      %400 = vperm.xlu0 %399, %v392
      %v401 = vpop.permute.xlu0 %400
      %404 = vst [vmem:[#allocation1] ss:$2 sm:$0xff] %v390
      %v405 = vld.sshfl [vmem:[#allocation1] sm:$0xff pattern:$0x75316420]
      %v406 = vld.sshfl [vmem:[#allocation1 + $0x8] sm:$0xff pattern:$0x75316420]
      %vm407 = vcmask 31744
      %v409 = vsel %vm407, %v388, 0
      %v412 = vsel %vm407, %v389, 0
      %vm414 = vcmask 1043456
      %v415 = vsel %vm414, %v405, 0
      %v417 = vsel %vm414, %v406, 0
      %419 = vmatpush.msra.mxu0 0.0
      %420 = vmatpush.msra.mxu0 0.0
      %421 = vmatpush.msra.mxu0 0.0
      %422 = vmatpush.msra.mxu0 0.0
      %423 = vmatpush.msra.mxu0 0.0
      %424 = vmatpush.msra.mxu0 0.0
      %425 = vmatpush.msra.mxu0 0.0
      %426 = vmatpush.msra.mxu0 0.0
      %427 = vmatpush.msra.mxu0 0.0
      %428 = vmatpush.msra.mxu0 0.0
      %429 = vmatpush.msra.mxu0 0.0
      %430 = vmatpush.msra.mxu0 0.0
      %431 = vmatpush.msra.mxu0 0.0
      %432 = vmatpush.msra.mxu0 0.0
      %433 = vmatpush.msra.mxu0 0.0
      %434 = vmatpush.msra.mxu0 %v415
      %435 = vmatmul.f32.gmra.mxu0 %v409
      %v436 = vpop.f32.mrf.mxu0
      %v437 = vadd.f32 %v396, %v436
      %438 = vmatmul.f32.gmra.mxu0 %v412
      %v439 = vpop.f32.mrf.mxu0
      %v440 = vadd.f32 %v401, %v439
      %441 = vdwg.mxu0
      %442 = vmatpush.msra.mxu0 0.0
      %443 = vmatpush.msra.mxu0 0.0
      %444 = vmatpush.msra.mxu0 0.0
      %445 = vmatpush.msra.mxu0 0.0
      %446 = vmatpush.msra.mxu0 0.0
      %447 = vmatpush.msra.mxu0 0.0
      %448 = vmatpush.msra.mxu0 0.0
      %449 = vmatpush.msra.mxu0 0.0
      %450 = vmatpush.msra.mxu0 0.0
      %451 = vmatpush.msra.mxu0 0.0
      %452 = vmatpush.msra.mxu0 0.0
      %453 = vmatpush.msra.mxu0 0.0
      %454 = vmatpush.msra.mxu0 0.0
      %455 = vmatpush.msra.mxu0 0.0
      %456 = vmatpush.msra.mxu0 0.0
      %457 = vmatpush.msra.mxu0 %v417
      %458 = vmatmul.f32.gmra.mxu0 %v409
      %v459 = vpop.f32.mrf.mxu0
      %v460 = vadd.f32 %v396, %v459
      %461 = vmatmul.f32.gmra.mxu0 %v412
      %v462 = vpop.f32.mrf.mxu0
      %v463 = vadd.f32 %v401, %v462
      %464 = vdwg.mxu0
      %465 = vst [vmem:[#allocation2] sm:$0xff] %v437
      %466 = vst [vmem:[#allocation2 + $0x8] sm:$0xff] %v460
      %467 = vst [vmem:[#allocation2 + $0x10] sm:$0xff] %v440
      %468 = vst [vmem:[#allocation2 + $0x18] sm:$0xff] %v463
      %469 = vrot.lane.b32.xlu0 %v437, 17
      %v470 = vpop.permute.xlu0 %469
      %471 = vrot.lane.b32.xlu0 %v440, 17
      %v472 = vpop.permute.xlu0 %471
      %473 = vrot.lane.b32.xlu0 %v460, 17
      %v474 = vpop.permute.xlu0 %473
      %475 = vrot.lane.b32.xlu0 %v463, 17
      %v476 = vpop.permute.xlu0 %475
      %v477 = vlaneseq
      %v478 = vand.u32 %v477, 127
      %vm479 = vcmp.lt.s32.totalorder %v478, 17
      %v480 = vsel %vm479, %v470, %v474
      %v481 = vsel %vm479, %v472, %v476
      %v482 = vsel %vm479, %v474, %v470
      %v483 = vsel %vm479, %v476, %v472
      %v484 = vld [vmem:[%s5] ss:$8 sm:$0x3]
      %v486 = vperm.slane %v484, 0
      %v487 = vperm.slane %v484, 1
      %v490 = vmul.f32 %v482, %v486
      %v491 = vmul.f32 %v480, %v487
      %v492 = vmul.f32 %v483, %v486
      %v493 = vmul.f32 %v481, %v487
      %v494 = vpack.c.bf16 %v491, %v490
      %v495 = vpack.c.bf16 %v493, %v492
      %496 = vrot.lane.b32.xlu0 %v437, 16
      %v497 = vpop.permute.xlu0 %496
      %498 = vrot.lane.b32.xlu0 %v440, 16
      %v499 = vpop.permute.xlu0 %498
      %500 = vrot.lane.b32.xlu0 %v460, 16
      %v501 = vpop.permute.xlu0 %500
      %502 = vrot.lane.b32.xlu0 %v463, 16
      %v503 = vpop.permute.xlu0 %502
      %vm504 = vcmp.lt.s32.totalorder %v478, 16
      %v505 = vsel %vm504, %v497, %v501
      %v506 = vsel %vm504, %v499, %v503
      %v507 = vsel %vm504, %v501, %v497
      %v508 = vsel %vm504, %v503, %v499
      %s509 = scalar_lea.vmem %s5, 1
      %v510 = vld [vmem:[%s509] ss:$8 sm:$0x3]
      %v512 = vperm.slane %v510, 0
      %v513 = vperm.slane %v510, 1
      %v516 = vmul.f32 %v507, %v512
      %v517 = vmul.f32 %v505, %v513
      %v518 = vmul.f32 %v508, %v512
      %v519 = vmul.f32 %v506, %v513
      %v520 = vpack.c.bf16 %v517, %v516
      %v521 = vpack.c.bf16 %v519, %v518
      %522 = vrot.lane.b32.xlu0 %v437, 15
      %v523 = vpop.permute.xlu0 %522
      %524 = vrot.lane.b32.xlu0 %v440, 15
      %v525 = vpop.permute.xlu0 %524
      %526 = vrot.lane.b32.xlu0 %v460, 15
      %v527 = vpop.permute.xlu0 %526
      %528 = vrot.lane.b32.xlu0 %v463, 15
      %v529 = vpop.permute.xlu0 %528
      %vm530 = vcmp.lt.s32.totalorder %v478, 15
      %v531 = vsel %vm530, %v523, %v527
      %v532 = vsel %vm530, %v525, %v529
      %v533 = vsel %vm530, %v527, %v523
      %v534 = vsel %vm530, %v529, %v525
      %s535 = scalar_lea.vmem %s5, 2
      %v536 = vld [vmem:[%s535] ss:$8 sm:$0x3]
      %v538 = vperm.slane %v536, 0
      %v539 = vperm.slane %v536, 1
      %v542 = vmul.f32 %v533, %v538
      %v543 = vmul.f32 %v531, %v539
      %v544 = vmul.f32 %v534, %v538
      %v545 = vmul.f32 %v532, %v539
      %v546 = vpack.c.bf16 %v543, %v542
      %v547 = vpack.c.bf16 %v545, %v544
      %548 = vrot.lane.b32.xlu0 %v437, 1
      %v549 = vpop.permute.xlu0 %548
      %550 = vrot.lane.b32.xlu0 %v440, 1
      %v551 = vpop.permute.xlu0 %550
      %552 = vrot.lane.b32.xlu0 %v460, 1
      %v553 = vpop.permute.xlu0 %552
      %554 = vrot.lane.b32.xlu0 %v463, 1
      %v555 = vpop.permute.xlu0 %554
      %vm556 = vcmp.lt.s32.totalorder %v478, 1
      %v557 = vsel %vm556, %v549, %v553
      %v558 = vsel %vm556, %v551, %v555
      %v559 = vsel %vm556, %v553, %v549
      %v560 = vsel %vm556, %v555, %v551
      %s561 = scalar_lea.vmem %s5, 3
      %v562 = vld [vmem:[%s561] ss:$8 sm:$0x3]
      %v564 = vperm.slane %v562, 0
      %v565 = vperm.slane %v562, 1
      %v568 = vmul.f32 %v559, %v564
      %v569 = vmul.f32 %v557, %v565
      %v570 = vmul.f32 %v560, %v564
      %v571 = vmul.f32 %v558, %v565
      %v572 = vpack.c.bf16 %v569, %v568
      %v573 = vpack.c.bf16 %v571, %v570
      %v574 = vpack.c.bf16 %v460, %v437
      %v575 = vpack.c.bf16 %v463, %v440
      %576 = vrot.lane.b32.xlu0 %v437, 127
      %v577 = vpop.permute.xlu0 %576
      %578 = vrot.lane.b32.xlu0 %v440, 127
      %v579 = vpop.permute.xlu0 %578
      %580 = vrot.lane.b32.xlu0 %v460, 127
      %v581 = vpop.permute.xlu0 %580
      %582 = vrot.lane.b32.xlu0 %v463, 127
      %v583 = vpop.permute.xlu0 %582
      %vm584 = vcmp.lt.s32.totalorder %v478, 127
      %v585 = vsel %vm584, %v577, %v581
      %v586 = vsel %vm584, %v579, %v583
      %v587 = vsel %vm584, %v581, %v577
      %v588 = vsel %vm584, %v583, %v579
      %s589 = scalar_lea.vmem %s5, 5
      %v590 = vld [vmem:[%s589] ss:$8 sm:$0x3]
      %v592 = vperm.slane %v590, 0
      %v593 = vperm.slane %v590, 1
      %v596 = vmul.f32 %v585, %v592
      %v597 = vmul.f32 %v587, %v593
      %v598 = vmul.f32 %v586, %v592
      %v599 = vmul.f32 %v588, %v593
      %v600 = vpack.c.bf16 %v597, %v596
      %v601 = vpack.c.bf16 %v599, %v598
      %602 = vrot.lane.b32.xlu0 %v437, 113
      %v603 = vpop.permute.xlu0 %602
      %604 = vrot.lane.b32.xlu0 %v440, 113
      %v605 = vpop.permute.xlu0 %604
      %606 = vrot.lane.b32.xlu0 %v460, 113
      %v607 = vpop.permute.xlu0 %606
      %608 = vrot.lane.b32.xlu0 %v463, 113
      %v609 = vpop.permute.xlu0 %608
      %vm610 = vcmp.lt.s32.totalorder %v478, 113
      %v611 = vsel %vm610, %v603, %v607
      %v612 = vsel %vm610, %v605, %v609
      %v613 = vsel %vm610, %v607, %v603
      %v614 = vsel %vm610, %v609, %v605
      %s615 = scalar_lea.vmem %s5, 6
      %v616 = vld [vmem:[%s615] ss:$8 sm:$0x3]
      %v618 = vperm.slane %v616, 0
      %v619 = vperm.slane %v616, 1
      %v622 = vmul.f32 %v611, %v618
      %v623 = vmul.f32 %v613, %v619
      %v624 = vmul.f32 %v612, %v618
      %v625 = vmul.f32 %v614, %v619
      %v626 = vpack.c.bf16 %v623, %v622
      %v627 = vpack.c.bf16 %v625, %v624
      %628 = vrot.lane.b32.xlu0 %v437, 112
      %v629 = vpop.permute.xlu0 %628
      %630 = vrot.lane.b32.xlu0 %v440, 112
      %v631 = vpop.permute.xlu0 %630
      %632 = vrot.lane.b32.xlu0 %v460, 112
      %v633 = vpop.permute.xlu0 %632
      %634 = vrot.lane.b32.xlu0 %v463, 112
      %v635 = vpop.permute.xlu0 %634
      %vm636 = vcmp.lt.s32.totalorder %v478, 112
      %v637 = vsel %vm636, %v629, %v633
      %v638 = vsel %vm636, %v631, %v635
      %v639 = vsel %vm636, %v633, %v629
      %v640 = vsel %vm636, %v635, %v631
      %s641 = scalar_lea.vmem %s5, 7
      %v642 = vld [vmem:[%s641] ss:$8 sm:$0x3]
      %v644 = vperm.slane %v642, 0
      %v645 = vperm.slane %v642, 1
      %v648 = vmul.f32 %v637, %v644
      %v649 = vmul.f32 %v639, %v645
      %v650 = vmul.f32 %v638, %v644
      %v651 = vmul.f32 %v640, %v645
      %v652 = vpack.c.bf16 %v649, %v648
      %v653 = vpack.c.bf16 %v651, %v650
      %654 = vrot.lane.b32.xlu0 %v437, 111
      %v655 = vpop.permute.xlu0 %654
      %656 = vrot.lane.b32.xlu0 %v440, 111
      %v657 = vpop.permute.xlu0 %656
      %658 = vrot.lane.b32.xlu0 %v460, 111
      %v659 = vpop.permute.xlu0 %658
      %660 = vrot.lane.b32.xlu0 %v463, 111
      %v661 = vpop.permute.xlu0 %660
      %vm662 = vcmp.lt.s32.totalorder %v478, 111
      %v663 = vsel %vm662, %v655, %v659
      %v664 = vsel %vm662, %v657, %v661
      %v665 = vsel %vm662, %v659, %v655
      %v666 = vsel %vm662, %v661, %v657
      %s667 = scalar_lea.vmem %s5, 16
      %v668 = vld [vmem:[%s667] ss:$8 sm:$0x3]
      %v670 = vperm.slane %v668, 0
      %v671 = vperm.slane %v668, 1
      %v674 = vmul.f32 %v663, %v670
      %v675 = vmul.f32 %v665, %v671
      %v676 = vmul.f32 %v664, %v670
      %v677 = vmul.f32 %v666, %v671
      %v678 = vpack.c.bf16 %v675, %v674
      %v679 = vpack.c.bf16 %v677, %v676
      %v682 = vunpack.c.l.b16 %v494
      %v683 = vunpack.c.h.b16 %v494
      %v684 = vunpack.c.l.b16 %v495
      %v685 = vunpack.c.h.b16 %v495
      %v686 = vpack.c.b16 %v684, %v682
      %v687 = vpack.c.b16 %v685, %v683
      %v692 = vunpack.c.l.b16 %v520
      %v693 = vunpack.c.h.b16 %v520
      %v694 = vunpack.c.l.b16 %v521
      %v695 = vunpack.c.h.b16 %v521
      %v696 = vpack.c.b16 %v694, %v692
      %v697 = vpack.c.b16 %v695, %v693
      %v702 = vunpack.c.l.b16 %v546
      %v703 = vunpack.c.h.b16 %v546
      %v704 = vunpack.c.l.b16 %v547
      %v705 = vunpack.c.h.b16 %v547
      %v706 = vpack.c.b16 %v704, %v702
      %v707 = vpack.c.b16 %v705, %v703
      %v712 = vunpack.c.l.b16 %v572
      %v713 = vunpack.c.h.b16 %v572
      %v714 = vunpack.c.l.b16 %v573
      %v715 = vunpack.c.h.b16 %v573
      %v716 = vpack.c.b16 %v714, %v712
      %v717 = vpack.c.b16 %v715, %v713
      %v722 = vunpack.c.l.b16 %v574
      %v723 = vunpack.c.h.b16 %v574
      %v724 = vunpack.c.l.b16 %v575
      %v725 = vunpack.c.h.b16 %v575
      %v726 = vpack.c.b16 %v724, %v722
      %v727 = vpack.c.b16 %v725, %v723
      %v732 = vunpack.c.l.b16 %v600
      %v733 = vunpack.c.h.b16 %v600
      %v734 = vunpack.c.l.b16 %v601
      %v735 = vunpack.c.h.b16 %v601
      %v736 = vpack.c.b16 %v734, %v732
      %v737 = vpack.c.b16 %v735, %v733
      %v742 = vunpack.c.l.b16 %v626
      %v743 = vunpack.c.h.b16 %v626
      %v744 = vunpack.c.l.b16 %v627
      %v745 = vunpack.c.h.b16 %v627
      %v746 = vpack.c.b16 %v744, %v742
      %v747 = vpack.c.b16 %v745, %v743
      %v752 = vunpack.c.l.b16 %v652
      %v753 = vunpack.c.h.b16 %v652
      %v754 = vunpack.c.l.b16 %v653
      %v755 = vunpack.c.h.b16 %v653
      %v756 = vpack.c.b16 %v754, %v752
      %v757 = vpack.c.b16 %v755, %v753
      %v762 = vunpack.c.l.b16 %v678
      %v763 = vunpack.c.h.b16 %v678
      %v764 = vunpack.c.l.b16 %v679
      %v765 = vunpack.c.h.b16 %v679
      %v766 = vpack.c.b16 %v764, %v762
      %v767 = vpack.c.b16 %v765, %v763
      %v770 = vld [vmem:[%s2] sm:$0xff]
      %v771 = vld [vmem:[%s2 + $0x8] sm:$0xff]
      %v774 = vunpack.c.l.b16 %v770
      %v775 = vunpack.c.h.b16 %v770
      %v776 = vunpack.c.l.b16 %v771
      %v777 = vunpack.c.h.b16 %v771
      %v778 = vpack.c.b16 %v776, %v774
      %v779 = vpack.c.b16 %v777, %v775
      %vm781 = vcmask 130048
      %v783 = vsel %vm781, %v779, 0
      %785 = vmatpush.bf16.msra.mxu0 %v756
      %786 = vmatpush.bf16.msra.mxu0 %v746
      %787 = vmatpush.bf16.msra.mxu0 %v736
      %788 = vmatpush.bf16.msra.mxu0 %v726
      %789 = vmatpush.bf16.msra.mxu0 %v716
      %790 = vmatpush.bf16.msra.mxu0 %v706
      %791 = vmatpush.bf16.msra.mxu0 %v696
      %792 = vmatpush.bf16.msra.mxu0 %v686
      %793 = vmatmul.bf16.gmra.mxu0 %v778
      %v794 = vpop.f32.mrf.mxu0
      %v795 = vadd.f32 0.0, %v794
      %v796 = vpop.f32.mrf.mxu0
      %v797 = vadd.f32 0.0, %v796
      %798 = vdwg.mxu0
      %799 = vmatpush.bf16.msra.mxu0 0
      %800 = vmatpush.bf16.msra.mxu0 0
      %801 = vmatpush.bf16.msra.mxu0 0
      %802 = vmatpush.bf16.msra.mxu0 0
      %803 = vmatpush.bf16.msra.mxu0 0
      %804 = vmatpush.bf16.msra.mxu0 0
      %805 = vmatpush.bf16.msra.mxu0 0
      %806 = vmatpush.bf16.msra.mxu0 %v766
      %807 = vmatmul.bf16.gmra.mxu0 %v783
      %v808 = vpop.f32.mrf.mxu0
      %v809 = vadd.f32 %v795, %v808
      %v810 = vpop.f32.mrf.mxu0
      %v811 = vadd.f32 %v797, %v810
      %812 = vdwg.mxu0
      %813 = vmatpush.bf16.msra.mxu0 %v757
      %814 = vmatpush.bf16.msra.mxu0 %v747
      %815 = vmatpush.bf16.msra.mxu0 %v737
      %816 = vmatpush.bf16.msra.mxu0 %v727
      %817 = vmatpush.bf16.msra.mxu0 %v717
      %818 = vmatpush.bf16.msra.mxu0 %v707
      %819 = vmatpush.bf16.msra.mxu0 %v697
      %820 = vmatpush.bf16.msra.mxu0 %v687
      %821 = vmatmul.bf16.gmra.mxu0 %v778
      %v822 = vpop.f32.mrf.mxu0
      %v823 = vadd.f32 0.0, %v822
      %v824 = vpop.f32.mrf.mxu0
      %v825 = vadd.f32 0.0, %v824
      %826 = vdwg.mxu0
      %827 = vmatpush.bf16.msra.mxu0 0
      %828 = vmatpush.bf16.msra.mxu0 0
      %829 = vmatpush.bf16.msra.mxu0 0
      %830 = vmatpush.bf16.msra.mxu0 0
      %831 = vmatpush.bf16.msra.mxu0 0
      %832 = vmatpush.bf16.msra.mxu0 0
      %833 = vmatpush.bf16.msra.mxu0 0
      %834 = vmatpush.bf16.msra.mxu0 %v767
      %835 = vmatmul.bf16.gmra.mxu0 %v783
      %v836 = vpop.f32.mrf.mxu0
      %v837 = vadd.f32 %v823, %v836
      %v838 = vpop.f32.mrf.mxu0
      %v839 = vadd.f32 %v825, %v838
      %840 = vdwg.mxu0
      %v841 = vld [vmem:[%s4 + $0x10] sm:$0xff]
      %v842 = vld [vmem:[%s4 + $0x18] sm:$0xff]
      %844 = vset.pattern.permute.xlu0 0
      %845 = vperm.xlu0 %844, %v841
      %v846 = vpop.permute.xlu0 %845
      %849 = vset.pattern.permute.xlu0 0
      %850 = vperm.xlu0 %849, %v842
      %v851 = vpop.permute.xlu0 %850
      %v853 = vmul.f32 %v809, %v846
      %v854 = vmul.f32 %v837, %v846
      %v855 = vmul.f32 %v811, %v851
      %v856 = vmul.f32 %v839, %v851
      %v857 = vld [vmem:[%s4 + $0x20] sm:$0xff]
      %v858 = vld [vmem:[%s4 + $0x28] sm:$0xff]
      %860 = vset.pattern.permute.xlu0 0
      %861 = vperm.xlu0 %860, %v857
      %v862 = vpop.permute.xlu0 %861
      %865 = vset.pattern.permute.xlu0 0
      %866 = vperm.xlu0 %865, %v858
      %v867 = vpop.permute.xlu0 %866
      %v869 = vadd.f32 %v853, %v862
      %v870 = vadd.f32 %v854, %v862
      %v871 = vadd.f32 %v855, %v867
      %v872 = vadd.f32 %v856, %v867
      %v873 = vmax.f32 %v869, 0.0
      %v874 = vmax.f32 %v870, 0.0
      %v875 = vmax.f32 %v871, 0.0
      %v876 = vmax.f32 %v872, 0.0
      %877 = vrot.lane.b32.xlu0 %v873, 17
      %v878 = vpop.permute.xlu0 %877
      %879 = vrot.lane.b32.xlu0 %v875, 17
      %v880 = vpop.permute.xlu0 %879
      %881 = vrot.lane.b32.xlu0 %v874, 17
      %v882 = vpop.permute.xlu0 %881
      %883 = vrot.lane.b32.xlu0 %v876, 17
      %v884 = vpop.permute.xlu0 %883
      %v885 = vsel %vm479, %v878, %v882
      %v886 = vsel %vm479, %v880, %v884
      %v887 = vsel %vm479, %v882, %v878
      %v888 = vsel %vm479, %v884, %v880
      %v889 = vmul.f32 %v887, %v486
      %v890 = vmul.f32 %v885, %v487
      %v891 = vmul.f32 %v888, %v486
      %v892 = vmul.f32 %v886, %v487
      %v893 = vpack.c.bf16 %v890, %v889
      %v894 = vpack.c.bf16 %v892, %v891
      %895 = vrot.lane.b32.xlu0 %v873, 16
      %v896 = vpop.permute.xlu0 %895
      %897 = vrot.lane.b32.xlu0 %v875, 16
      %v898 = vpop.permute.xlu0 %897
      %899 = vrot.lane.b32.xlu0 %v874, 16
      %v900 = vpop.permute.xlu0 %899
      %901 = vrot.lane.b32.xlu0 %v876, 16
      %v902 = vpop.permute.xlu0 %901
      %v903 = vsel %vm504, %v896, %v900
      %v904 = vsel %vm504, %v898, %v902
      %v905 = vsel %vm504, %v900, %v896
      %v906 = vsel %vm504, %v902, %v898
      %v907 = vmul.f32 %v905, %v512
      %v908 = vmul.f32 %v903, %v513
      %v909 = vmul.f32 %v906, %v512
      %v910 = vmul.f32 %v904, %v513
      %v911 = vpack.c.bf16 %v908, %v907
      %v912 = vpack.c.bf16 %v910, %v909
      %913 = vrot.lane.b32.xlu0 %v873, 15
      %v914 = vpop.permute.xlu0 %913
      %915 = vrot.lane.b32.xlu0 %v875, 15
      %v916 = vpop.permute.xlu0 %915
      %917 = vrot.lane.b32.xlu0 %v874, 15
      %v918 = vpop.permute.xlu0 %917
      %919 = vrot.lane.b32.xlu0 %v876, 15
      %v920 = vpop.permute.xlu0 %919
      %v921 = vsel %vm530, %v914, %v918
      %v922 = vsel %vm530, %v916, %v920
      %v923 = vsel %vm530, %v918, %v914
      %v924 = vsel %vm530, %v920, %v916
      %v925 = vmul.f32 %v923, %v538
      %v926 = vmul.f32 %v921, %v539
      %v927 = vmul.f32 %v924, %v538
      %v928 = vmul.f32 %v922, %v539
      %v929 = vpack.c.bf16 %v926, %v925
      %v930 = vpack.c.bf16 %v928, %v927
      %931 = vrot.lane.b32.xlu0 %v873, 1
      %v932 = vpop.permute.xlu0 %931
      %933 = vrot.lane.b32.xlu0 %v875, 1
      %v934 = vpop.permute.xlu0 %933
      %935 = vrot.lane.b32.xlu0 %v874, 1
      %v936 = vpop.permute.xlu0 %935
      %937 = vrot.lane.b32.xlu0 %v876, 1
      %v938 = vpop.permute.xlu0 %937
      %v939 = vsel %vm556, %v932, %v936
      %v940 = vsel %vm556, %v934, %v938
      %v941 = vsel %vm556, %v936, %v932
      %v942 = vsel %vm556, %v938, %v934
      %v943 = vmul.f32 %v941, %v564
      %v944 = vmul.f32 %v939, %v565
      %v945 = vmul.f32 %v942, %v564
      %v946 = vmul.f32 %v940, %v565
      %v947 = vpack.c.bf16 %v944, %v943
      %v948 = vpack.c.bf16 %v946, %v945
      %v949 = vpack.c.bf16 %v874, %v873
      %v950 = vpack.c.bf16 %v876, %v875
      %951 = vrot.lane.b32.xlu0 %v873, 127
      %v952 = vpop.permute.xlu0 %951
      %953 = vrot.lane.b32.xlu0 %v875, 127
      %v954 = vpop.permute.xlu0 %953
      %955 = vrot.lane.b32.xlu0 %v874, 127
      %v956 = vpop.permute.xlu0 %955
      %957 = vrot.lane.b32.xlu0 %v876, 127
      %v958 = vpop.permute.xlu0 %957
      %v959 = vsel %vm584, %v952, %v956
      %v960 = vsel %vm584, %v954, %v958
      %v961 = vsel %vm584, %v956, %v952
      %v962 = vsel %vm584, %v958, %v954
      %v963 = vmul.f32 %v959, %v592
      %v964 = vmul.f32 %v961, %v593
      %v965 = vmul.f32 %v960, %v592
      %v966 = vmul.f32 %v962, %v593
      %v967 = vpack.c.bf16 %v964, %v963
      %v968 = vpack.c.bf16 %v966, %v965
      %969 = vrot.lane.b32.xlu0 %v873, 113
      %v970 = vpop.permute.xlu0 %969
      %971 = vrot.lane.b32.xlu0 %v875, 113
      %v972 = vpop.permute.xlu0 %971
      %973 = vrot.lane.b32.xlu0 %v874, 113
      %v974 = vpop.permute.xlu0 %973
      %975 = vrot.lane.b32.xlu0 %v876, 113
      %v976 = vpop.permute.xlu0 %975
      %v977 = vsel %vm610, %v970, %v974
      %v978 = vsel %vm610, %v972, %v976
      %v979 = vsel %vm610, %v974, %v970
      %v980 = vsel %vm610, %v976, %v972
      %v981 = vmul.f32 %v977, %v618
      %v982 = vmul.f32 %v979, %v619
      %v983 = vmul.f32 %v978, %v618
      %v984 = vmul.f32 %v980, %v619
      %v985 = vpack.c.bf16 %v982, %v981
      %v986 = vpack.c.bf16 %v984, %v983
      %987 = vrot.lane.b32.xlu0 %v873, 112
      %v988 = vpop.permute.xlu0 %987
      %989 = vrot.lane.b32.xlu0 %v875, 112
      %v990 = vpop.permute.xlu0 %989
      %991 = vrot.lane.b32.xlu0 %v874, 112
      %v992 = vpop.permute.xlu0 %991
      %993 = vrot.lane.b32.xlu0 %v876, 112
      %v994 = vpop.permute.xlu0 %993
      %v995 = vsel %vm636, %v988, %v992
      %v996 = vsel %vm636, %v990, %v994
      %v997 = vsel %vm636, %v992, %v988
      %v998 = vsel %vm636, %v994, %v990
      %v999 = vmul.f32 %v995, %v644
      %v1000 = vmul.f32 %v997, %v645
      %v1001 = vmul.f32 %v996, %v644
      %v1002 = vmul.f32 %v998, %v645
      %v1003 = vpack.c.bf16 %v1000, %v999
      %v1004 = vpack.c.bf16 %v1002, %v1001
      %1005 = vrot.lane.b32.xlu0 %v873, 111
      %v1006 = vpop.permute.xlu0 %1005
      %1007 = vrot.lane.b32.xlu0 %v875, 111
      %v1008 = vpop.permute.xlu0 %1007
      %1009 = vrot.lane.b32.xlu0 %v874, 111
      %v1010 = vpop.permute.xlu0 %1009
      %1011 = vrot.lane.b32.xlu0 %v876, 111
      %v1012 = vpop.permute.xlu0 %1011
      %v1013 = vsel %vm662, %v1006, %v1010
      %v1014 = vsel %vm662, %v1008, %v1012
      %v1015 = vsel %vm662, %v1010, %v1006
      %v1016 = vsel %vm662, %v1012, %v1008
      %v1017 = vmul.f32 %v1013, %v670
      %v1018 = vmul.f32 %v1015, %v671
      %v1019 = vmul.f32 %v1014, %v670
      %v1020 = vmul.f32 %v1016, %v671
      %v1021 = vpack.c.bf16 %v1018, %v1017
      %v1022 = vpack.c.bf16 %v1020, %v1019
      %v1025 = vunpack.c.l.b16 %v893
      %v1026 = vunpack.c.h.b16 %v893
      %v1027 = vunpack.c.l.b16 %v894
      %v1028 = vunpack.c.h.b16 %v894
      %v1029 = vpack.c.b16 %v1027, %v1025
      %v1030 = vpack.c.b16 %v1028, %v1026
      %v1035 = vunpack.c.l.b16 %v911
      %v1036 = vunpack.c.h.b16 %v911
      %v1037 = vunpack.c.l.b16 %v912
      %v1038 = vunpack.c.h.b16 %v912
      %v1039 = vpack.c.b16 %v1037, %v1035
      %v1040 = vpack.c.b16 %v1038, %v1036
      %v1045 = vunpack.c.l.b16 %v929
      %v1046 = vunpack.c.h.b16 %v929
      %v1047 = vunpack.c.l.b16 %v930
      %v1048 = vunpack.c.h.b16 %v930
      %v1049 = vpack.c.b16 %v1047, %v1045
      %v1050 = vpack.c.b16 %v1048, %v1046
      %v1055 = vunpack.c.l.b16 %v947
      %v1056 = vunpack.c.h.b16 %v947
      %v1057 = vunpack.c.l.b16 %v948
      %v1058 = vunpack.c.h.b16 %v948
      %v1059 = vpack.c.b16 %v1057, %v1055
      %v1060 = vpack.c.b16 %v1058, %v1056
      %v1065 = vunpack.c.l.b16 %v949
      %v1066 = vunpack.c.h.b16 %v949
      %v1067 = vunpack.c.l.b16 %v950
      %v1068 = vunpack.c.h.b16 %v950
      %v1069 = vpack.c.b16 %v1067, %v1065
      %v1070 = vpack.c.b16 %v1068, %v1066
      %v1075 = vunpack.c.l.b16 %v967
      %v1076 = vunpack.c.h.b16 %v967
      %v1077 = vunpack.c.l.b16 %v968
      %v1078 = vunpack.c.h.b16 %v968
      %v1079 = vpack.c.b16 %v1077, %v1075
      %v1080 = vpack.c.b16 %v1078, %v1076
      %v1085 = vunpack.c.l.b16 %v985
      %v1086 = vunpack.c.h.b16 %v985
      %v1087 = vunpack.c.l.b16 %v986
      %v1088 = vunpack.c.h.b16 %v986
      %v1089 = vpack.c.b16 %v1087, %v1085
      %v1090 = vpack.c.b16 %v1088, %v1086
      %v1095 = vunpack.c.l.b16 %v1003
      %v1096 = vunpack.c.h.b16 %v1003
      %v1097 = vunpack.c.l.b16 %v1004
      %v1098 = vunpack.c.h.b16 %v1004
      %v1099 = vpack.c.b16 %v1097, %v1095
      %v1100 = vpack.c.b16 %v1098, %v1096
      %v1105 = vunpack.c.l.b16 %v1021
      %v1106 = vunpack.c.h.b16 %v1021
      %v1107 = vunpack.c.l.b16 %v1022
      %v1108 = vunpack.c.h.b16 %v1022
      %v1109 = vpack.c.b16 %v1107, %v1105
      %v1110 = vpack.c.b16 %v1108, %v1106
      %s1113 = scalar_lea.vmem %s2, 16
      %v1114 = vld [vmem:[%s1113] sm:$0xff]
      %v1115 = vld [vmem:[%s1113 + $0x8] sm:$0xff]
      %v1116 = vld [vmem:[%s4 + $0x30] sm:$0xff]
      %v1117 = vld [vmem:[%s4 + $0x38] sm:$0xff]
      %1119 = vset.pattern.permute.xlu0 0
      %1120 = vperm.xlu0 %1119, %v1116
      %v1121 = vpop.permute.xlu0 %1120
      %1124 = vset.pattern.permute.xlu0 0
      %1125 = vperm.xlu0 %1124, %v1117
      %v1126 = vpop.permute.xlu0 %1125
      %v1130 = vunpack.c.l.b16 %v1114
      %v1131 = vunpack.c.h.b16 %v1114
      %v1132 = vunpack.c.l.b16 %v1115
      %v1133 = vunpack.c.h.b16 %v1115
      %v1134 = vpack.c.b16 %v1132, %v1130
      %v1135 = vpack.c.b16 %v1133, %v1131
      %v1138 = vsel %vm781, %v1135, 0
      %1140 = vmatpush.bf16.msra.mxu0 %v1099
      %1141 = vmatpush.bf16.msra.mxu0 %v1089
      %1142 = vmatpush.bf16.msra.mxu0 %v1079
      %1143 = vmatpush.bf16.msra.mxu0 %v1069
      %1144 = vmatpush.bf16.msra.mxu0 %v1059
      %1145 = vmatpush.bf16.msra.mxu0 %v1049
      %1146 = vmatpush.bf16.msra.mxu0 %v1039
      %1147 = vmatpush.bf16.msra.mxu0 %v1029
      %1148 = vmatmul.bf16.gmra.mxu0 %v1134
      %v1149 = vpop.f32.mrf.mxu0
      %v1150 = vadd.f32 %v1121, %v1149
      %v1151 = vpop.f32.mrf.mxu0
      %v1152 = vadd.f32 %v1126, %v1151
      %1153 = vdwg.mxu0
      %1154 = vmatpush.bf16.msra.mxu0 0
      %1155 = vmatpush.bf16.msra.mxu0 0
      %1156 = vmatpush.bf16.msra.mxu0 0
      %1157 = vmatpush.bf16.msra.mxu0 0
      %1158 = vmatpush.bf16.msra.mxu0 0
      %1159 = vmatpush.bf16.msra.mxu0 0
      %1160 = vmatpush.bf16.msra.mxu0 0
      %1161 = vmatpush.bf16.msra.mxu0 %v1109
      %1162 = vmatmul.bf16.gmra.mxu0 %v1138
      %v1163 = vpop.f32.mrf.mxu0
      %v1164 = vadd.f32 %v1150, %v1163
      %v1165 = vpop.f32.mrf.mxu0
      %v1166 = vadd.f32 %v1152, %v1165
      %1167 = vdwg.mxu0
      %1168 = vmatpush.bf16.msra.mxu0 %v1100
      %1169 = vmatpush.bf16.msra.mxu0 %v1090
      %1170 = vmatpush.bf16.msra.mxu0 %v1080
      %1171 = vmatpush.bf16.msra.mxu0 %v1070
      %1172 = vmatpush.bf16.msra.mxu0 %v1060
      %1173 = vmatpush.bf16.msra.mxu0 %v1050
      %1174 = vmatpush.bf16.msra.mxu0 %v1040
      %1175 = vmatpush.bf16.msra.mxu0 %v1030
      %1176 = vmatmul.bf16.gmra.mxu0 %v1134
      %v1177 = vpop.f32.mrf.mxu0
      %v1178 = vadd.f32 %v1121, %v1177
      %v1179 = vpop.f32.mrf.mxu0
      %v1180 = vadd.f32 %v1126, %v1179
      %1181 = vdwg.mxu0
      %1182 = vmatpush.bf16.msra.mxu0 0
      %1183 = vmatpush.bf16.msra.mxu0 0
      %1184 = vmatpush.bf16.msra.mxu0 0
      %1185 = vmatpush.bf16.msra.mxu0 0
      %1186 = vmatpush.bf16.msra.mxu0 0
      %1187 = vmatpush.bf16.msra.mxu0 0
      %1188 = vmatpush.bf16.msra.mxu0 0
      %1189 = vmatpush.bf16.msra.mxu0 %v1110
      %1190 = vmatmul.bf16.gmra.mxu0 %v1138
      %v1191 = vpop.f32.mrf.mxu0
      %v1192 = vadd.f32 %v1178, %v1191
      %v1193 = vpop.f32.mrf.mxu0
      %v1194 = vadd.f32 %v1180, %v1193
      %1195 = vdwg.mxu0
      %v1196 = vld [vmem:[%s6] sm:$0xff]
      %v1197 = vld [vmem:[%s6 + $0x8] sm:$0xff]
      %v1198 = vld [vmem:[%s6 + $0x10] sm:$0xff]
      %v1199 = vld [vmem:[%s6 + $0x18] sm:$0xff]
      %v1200 = vld [vmem:[%s6 + $0x20] sm:$0xff]
      %v1201 = vld [vmem:[%s6 + $0x28] sm:$0xff]
      %v1202 = vld [vmem:[%s6 + $0x30] sm:$0xff]
      %v1203 = vld [vmem:[%s6 + $0x38] sm:$0xff]
      %v1204 = vld [vmem:[%s6 + $0x40] sm:$0xff]
      %v1205 = vld [vmem:[%s6 + $0x48] sm:$0xff]
      %v1206 = vld [vmem:[%s6 + $0x50] sm:$0xff]
      %v1207 = vld [vmem:[%s6 + $0x58] sm:$0xff]
      %v1208 = vld [vmem:[%s6 + $0x60] sm:$0xff]
      %v1209 = vld [vmem:[%s6 + $0x68] sm:$0xff]
      %v1210 = vld [vmem:[%s6 + $0x70] sm:$0xff]
      %v1211 = vld [vmem:[%s6 + $0x78] sm:$0xff]
      %v1212 = vld [vmem:[%s6 + $0x80] sm:$0xff]
      %v1213 = vld [vmem:[%s6 + $0x88] sm:$0xff]
      %v1214 = vld [vmem:[%s6 + $0x90] sm:$0xff]
      %v1215 = vld [vmem:[%s6 + $0x98] sm:$0xff]
      %v1216 = vld [vmem:[%s6 + $0xa0] sm:$0xff]
      %v1217 = vld [vmem:[%s6 + $0xa8] sm:$0xff]
      %v1218 = vld [vmem:[%s6 + $0xb0] sm:$0xff]
      %v1219 = vld [vmem:[%s6 + $0xb8] sm:$0xff]
      %v1220 = vld [vmem:[%s6 + $0xc0] sm:$0xff]
      %v1221 = vld [vmem:[%s6 + $0xc8] sm:$0xff]
      %v1222 = vld [vmem:[%s6 + $0xd0] sm:$0xff]
      %v1223 = vld [vmem:[%s6 + $0xd8] sm:$0xff]
      %v1224 = vld [vmem:[%s6 + $0xe0] sm:$0xff]
      %v1225 = vld [vmem:[%s6 + $0xe8] sm:$0xff]
      %v1226 = vld [vmem:[%s6 + $0xf0] sm:$0xff]
      %v1227 = vld [vmem:[%s6 + $0xf8] sm:$0xff]
      %1228 = vmatpush.msra.mxu0 %v1211
      %1229 = vmatpush.msra.mxu0 %v1210
      %1230 = vmatpush.msra.mxu0 %v1209
      %1231 = vmatpush.msra.mxu0 %v1208
      %1232 = vmatpush.msra.mxu0 %v1207
      %1233 = vmatpush.msra.mxu0 %v1206
      %1234 = vmatpush.msra.mxu0 %v1205
      %1235 = vmatpush.msra.mxu0 %v1204
      %1236 = vmatpush.msra.mxu0 %v1203
      %1237 = vmatpush.msra.mxu0 %v1202
      %1238 = vmatpush.msra.mxu0 %v1201
      %1239 = vmatpush.msra.mxu0 %v1200
      %1240 = vmatpush.msra.mxu0 %v1199
      %1241 = vmatpush.msra.mxu0 %v1198
      %1242 = vmatpush.msra.mxu0 %v1197
      %1243 = vmatpush.msra.mxu0 %v1196
      %1244 = vmatmul.f32.gmra.mxu0 %v1164
      %v1245 = vpop.f32.mrf.mxu0
      %v1246 = vadd.f32 0.0, %v1245
      %1247 = vmatmul.f32.gmra.mxu0 %v1166
      %v1248 = vpop.f32.mrf.mxu0
      %v1249 = vadd.f32 0.0, %v1248
      %1250 = vdwg.mxu0
      %1251 = vmatpush.msra.mxu0 %v1227
      %1252 = vmatpush.msra.mxu0 %v1226
      %1253 = vmatpush.msra.mxu0 %v1225
      %1254 = vmatpush.msra.mxu0 %v1224
      %1255 = vmatpush.msra.mxu0 %v1223
      %1256 = vmatpush.msra.mxu0 %v1222
      %1257 = vmatpush.msra.mxu0 %v1221
      %1258 = vmatpush.msra.mxu0 %v1220
      %1259 = vmatpush.msra.mxu0 %v1219
      %1260 = vmatpush.msra.mxu0 %v1218
      %1261 = vmatpush.msra.mxu0 %v1217
      %1262 = vmatpush.msra.mxu0 %v1216
      %1263 = vmatpush.msra.mxu0 %v1215
      %1264 = vmatpush.msra.mxu0 %v1214
      %1265 = vmatpush.msra.mxu0 %v1213
      %1266 = vmatpush.msra.mxu0 %v1212
      %1267 = vmatmul.f32.gmra.mxu0 %v1192
      %v1268 = vpop.f32.mrf.mxu0
      %v1269 = vadd.f32 %v1246, %v1268
      %1270 = vmatmul.f32.gmra.mxu0 %v1194
      %v1271 = vpop.f32.mrf.mxu0
      %v1272 = vadd.f32 %v1249, %v1271
      %1273 = vdwg.mxu0
      %v1274 = vld [vmem:[%s3] sm:$0xff]
      %v1275 = vld [vmem:[%s3 + $0x8] sm:$0xff]
      %v1276 = vld [vmem:[%s4 + $0x40] sm:$0xff]
      %v1277 = vld [vmem:[%s4 + $0x48] sm:$0xff]
      %1279 = vset.pattern.permute.xlu0 0
      %1280 = vperm.xlu0 %1279, %v1276
      %v1281 = vpop.permute.xlu0 %1280
      %1284 = vset.pattern.permute.xlu0 0
      %1285 = vperm.xlu0 %1284, %v1277
      %v1286 = vpop.permute.xlu0 %1285
      %v1289 = vsel %vm781, %v1274, 0
      %v1292 = vsel %vm781, %v1275, 0
      %1294 = vmatpush.msra.mxu0 0.0
      %1295 = vmatpush.msra.mxu0 0.0
      %1296 = vmatpush.msra.mxu0 0.0
      %1297 = vmatpush.msra.mxu0 0.0
      %1298 = vmatpush.msra.mxu0 0.0
      %1299 = vmatpush.msra.mxu0 0.0
      %1300 = vmatpush.msra.mxu0 0.0
      %1301 = vmatpush.msra.mxu0 0.0
      %1302 = vmatpush.msra.mxu0 0.0
      %1303 = vmatpush.msra.mxu0 0.0
      %1304 = vmatpush.msra.mxu0 0.0
      %1305 = vmatpush.msra.mxu0 0.0
      %1306 = vmatpush.msra.mxu0 0.0
      %1307 = vmatpush.msra.mxu0 0.0
      %1308 = vmatpush.msra.mxu0 %v1272
      %1309 = vmatpush.msra.mxu0 %v1269
      %1310 = vmatmul.f32.gmra.mxu0 %v1289
      %v1311 = vpop.f32.mrf.mxu0
      %v1312 = vadd.f32 %v1281, %v1311
      %1313 = vmatmul.f32.gmra.mxu0 %v1292
      %v1314 = vpop.f32.mrf.mxu0
      %v1315 = vadd.f32 %v1286, %v1314
      %1316 = vdwg.mxu0
      %v1317 = vxor.u32 %v1312, 2147483648
      %v1318 = vxor.u32 %v1315, 2147483648
      %v1319 = vmul.f32 %v1317, 1.442695
      %v1320 = vpow.pop %v1319
      %v1321 = vmul.f32 %v1318, 1.442695
      %v1322 = vpow.pop %v1321
      %v1323 = vadd.f32 %v1320, 1.0
      %v1324 = vadd.f32 %v1322, 1.0
      %v1325 = vrcp.pop %v1323
      %v1326 = vmul.f32 %v1323, %v1325
      %v1327 = vsub.f32 1.0, %v1326
      %v1328 = vmul.f32 %v1325, %v1327
      %v1329 = vadd.f32 %v1325, %v1328
      %vm1330 = vweird.f32 %v1323
      %vm1331 = vweird.f32 %v1325
      %vm1332 = vmor %vm1330, %vm1331
      %v1333 = vsel %vm1332, %v1325, %v1329
      %v1334 = vand.u32 2147483647, %v1323
      %vm1335 = vcmp.eq.f32.partialorder %v1334, 8.507059e+37
      %v1336 = vand.u32 %v1323, 2147483648
      %v1337 = vor.u32 1.1754944e-38, %v1336
      %v1338 = vsel %vm1335, %v1337, %v1333
      %v1339 = vmul.f32 1.0, %v1338
      %v1340 = vrcp.pop %v1324
      %v1341 = vmul.f32 %v1324, %v1340
      %v1342 = vsub.f32 1.0, %v1341
      %v1343 = vmul.f32 %v1340, %v1342
      %v1344 = vadd.f32 %v1340, %v1343
      %vm1345 = vweird.f32 %v1324
      %vm1346 = vweird.f32 %v1340
      %vm1347 = vmor %vm1345, %vm1346
      %v1348 = vsel %vm1347, %v1340, %v1344
      %v1349 = vand.u32 2147483647, %v1324
      %vm1350 = vcmp.eq.f32.partialorder %v1349, 8.507059e+37
      %v1351 = vand.u32 %v1324, 2147483648
      %v1352 = vor.u32 1.1754944e-38, %v1351
      %v1353 = vsel %vm1350, %v1352, %v1348
      %v1354 = vmul.f32 1.0, %v1353
      %v1355 = vld [vmem:[%s7] sm:$0xff]
      %v1356 = vld [vmem:[%s7 + $0x8] sm:$0xff]
      %v1357 = vld [vmem:[%s7 + $0x10] sm:$0xff]
      %v1358 = vld [vmem:[%s7 + $0x18] sm:$0xff]
      %v1359 = vld [vmem:[%s7 + $0x20] sm:$0xff]
      %v1360 = vld [vmem:[%s7 + $0x28] sm:$0xff]
      %v1361 = vld [vmem:[%s7 + $0x30] sm:$0xff]
      %v1362 = vld [vmem:[%s7 + $0x38] sm:$0xff]
      %vm1363 = vcmask 261120
      %v1365 = vsel %vm1363, %v1339, 0
      %v1368 = vsel %vm1363, %v1354, 0
      %1370 = vmatpush.msra.mxu0 0.0
      %1371 = vmatpush.msra.mxu0 0.0
      %1372 = vmatpush.msra.mxu0 0.0
      %1373 = vmatpush.msra.mxu0 0.0
      %1374 = vmatpush.msra.mxu0 0.0
      %1375 = vmatpush.msra.mxu0 0.0
      %1376 = vmatpush.msra.mxu0 0.0
      %1377 = vmatpush.msra.mxu0 0.0
      %1378 = vmatpush.msra.mxu0 0.0
      %1379 = vmatpush.msra.mxu0 0.0
      %1380 = vmatpush.msra.mxu0 0.0
      %1381 = vmatpush.msra.mxu0 0.0
      %1382 = vmatpush.msra.mxu0 %v1361
      %1383 = vmatpush.msra.mxu0 %v1359
      %1384 = vmatpush.msra.mxu0 %v1357
      %1385 = vmatpush.msra.mxu0 %v1355
      %1386 = vmatmul.f32.gmra.mxu0 %v1365
      %v1387 = vpop.f32.mrf.mxu0
      %v1388 = vadd.f32 0.0, %v1387
      %1389 = vmatmul.f32.gmra.mxu0 %v1368
      %v1390 = vpop.f32.mrf.mxu0
      %v1391 = vadd.f32 0.0, %v1390
      %1392 = vdwg.mxu0
      %1393 = vmatpush.msra.mxu0 0.0
      %1394 = vmatpush.msra.mxu0 0.0
      %1395 = vmatpush.msra.mxu0 0.0
      %1396 = vmatpush.msra.mxu0 0.0
      %1397 = vmatpush.msra.mxu0 0.0
      %1398 = vmatpush.msra.mxu0 0.0
      %1399 = vmatpush.msra.mxu0 0.0
      %1400 = vmatpush.msra.mxu0 0.0
      %1401 = vmatpush.msra.mxu0 0.0
      %1402 = vmatpush.msra.mxu0 0.0
      %1403 = vmatpush.msra.mxu0 0.0
      %1404 = vmatpush.msra.mxu0 0.0
      %1405 = vmatpush.msra.mxu0 %v1362
      %1406 = vmatpush.msra.mxu0 %v1360
      %1407 = vmatpush.msra.mxu0 %v1358
      %1408 = vmatpush.msra.mxu0 %v1356
      %1409 = vmatmul.f32.gmra.mxu0 %v1365
      %v1410 = vpop.f32.mrf.mxu0
      %v1411 = vadd.f32 0.0, %v1410
      %1412 = vmatmul.f32.gmra.mxu0 %v1368
      %v1413 = vpop.f32.mrf.mxu0
      %v1414 = vadd.f32 0.0, %v1413
      %1415 = vdwg.mxu0
      %v1416 = vld [vmem:[%s7 + $0x40] sm:$0xff]
      %v1417 = vld [vmem:[%s7 + $0x48] sm:$0xff]
      %v1418 = vld [vmem:[%s7 + $0x50] sm:$0xff]
      %v1419 = vld [vmem:[%s7 + $0x58] sm:$0xff]
      %v1420 = vld [vmem:[%s7 + $0x60] sm:$0xff]
      %v1421 = vld [vmem:[%s7 + $0x68] sm:$0xff]
      %v1422 = vld [vmem:[%s7 + $0x70] sm:$0xff]
      %v1423 = vld [vmem:[%s7 + $0x78] sm:$0xff]
      %1424 = vmatpush.msra.mxu0 0.0
      %1425 = vmatpush.msra.mxu0 0.0
      %1426 = vmatpush.msra.mxu0 0.0
      %1427 = vmatpush.msra.mxu0 0.0
      %1428 = vmatpush.msra.mxu0 0.0
      %1429 = vmatpush.msra.mxu0 0.0
      %1430 = vmatpush.msra.mxu0 0.0
      %1431 = vmatpush.msra.mxu0 0.0
      %1432 = vmatpush.msra.mxu0 0.0
      %1433 = vmatpush.msra.mxu0 0.0
      %1434 = vmatpush.msra.mxu0 0.0
      %1435 = vmatpush.msra.mxu0 0.0
      %1436 = vmatpush.msra.mxu0 %v1422
      %1437 = vmatpush.msra.mxu0 %v1420
      %1438 = vmatpush.msra.mxu0 %v1418
      %1439 = vmatpush.msra.mxu0 %v1416
      %1440 = vmatmul.f32.gmra.mxu0 %v1365
      %v1441 = vpop.f32.mrf.mxu0
      %v1442 = vadd.f32 0.0, %v1441
      %1443 = vmatmul.f32.gmra.mxu0 %v1368
      %v1444 = vpop.f32.mrf.mxu0
      %v1445 = vadd.f32 0.0, %v1444
      %1446 = vdwg.mxu0
      %1447 = vmatpush.msra.mxu0 0.0
      %1448 = vmatpush.msra.mxu0 0.0
      %1449 = vmatpush.msra.mxu0 0.0
      %1450 = vmatpush.msra.mxu0 0.0
      %1451 = vmatpush.msra.mxu0 0.0
      %1452 = vmatpush.msra.mxu0 0.0
      %1453 = vmatpush.msra.mxu0 0.0
      %1454 = vmatpush.msra.mxu0 0.0
      %1455 = vmatpush.msra.mxu0 0.0
      %1456 = vmatpush.msra.mxu0 0.0
      %1457 = vmatpush.msra.mxu0 0.0
      %1458 = vmatpush.msra.mxu0 0.0
      %1459 = vmatpush.msra.mxu0 %v1423
      %1460 = vmatpush.msra.mxu0 %v1421
      %1461 = vmatpush.msra.mxu0 %v1419
      %1462 = vmatpush.msra.mxu0 %v1417
      %1463 = vmatmul.f32.gmra.mxu0 %v1365
      %v1464 = vpop.f32.mrf.mxu0
      %v1465 = vadd.f32 0.0, %v1464
      %1466 = vmatmul.f32.gmra.mxu0 %v1368
      %v1467 = vpop.f32.mrf.mxu0
      %v1468 = vadd.f32 0.0, %v1467
      %1469 = vdwg.mxu0
      %v1470 = vmul.f32 %v1164, %v1388
      %v1471 = vmul.f32 %v1192, %v1411
      %v1472 = vmul.f32 %v1166, %v1391
      %v1473 = vmul.f32 %v1194, %v1414
      %v1474 = vmul.f32 %v1470, %v1442
      %v1475 = vmul.f32 %v1471, %v1465
      %v1476 = vmul.f32 %v1472, %v1445
      %v1477 = vmul.f32 %v1473, %v1468
      %v1478 = vadd.f32 %v1474, %v1475
      %1479 = vadd.xlane.f32.xlu0 %v1478
      %v1480 = vpop.xlane.xlu0 %1479
      %v1481 = vadd.f32 %v1476, %v1477
      %1482 = vadd.xlane.f32.xlu0 %v1481
      %v1483 = vpop.xlane.xlu0 %1482
      %v1484 = vrcp.pop 256.0
      %v1485 = vmul.f32 256.0, %v1484
      %v1486 = vsub.f32 1.0, %v1485
      %v1487 = vmul.f32 %v1484, %v1486
      %v1488 = vadd.f32 %v1484, %v1487
      %vm1489 = vweird.f32 %v1484
      %v1490 = vsel %vm1489, %v1484, %v1488
      %v1491 = vmul.f32 %v1480, %v1490
      %v1492 = vmul.f32 %v1483, %v1490
      %v1493 = vsub.f32 %v1474, %v1491
      %v1494 = vsub.f32 %v1475, %v1491
      %v1495 = vsub.f32 %v1476, %v1492
      %v1496 = vsub.f32 %v1477, %v1492
      %v1497 = vmul.f32 %v1493, %v1493
      %v1498 = vmul.f32 %v1494, %v1494
      %v1499 = vmul.f32 %v1495, %v1495
      %v1500 = vmul.f32 %v1496, %v1496
      %v1501 = vadd.f32 %v1497, %v1498
      %1502 = vadd.xlane.f32.xlu0 %v1501
      %v1503 = vpop.xlane.xlu0 %1502
      %v1504 = vadd.f32 %v1499, %v1500
      %1505 = vadd.xlane.f32.xlu0 %v1504
      %v1506 = vpop.xlane.xlu0 %1505
      %v1507 = vmul.f32 %v1503, %v1490
      %v1508 = vmul.f32 %v1506, %v1490
      %v1509 = vadd.f32 %v1507, 1e-05
      %v1510 = vadd.f32 %v1508, 1e-05
      %v1511 = vrsqrt.pop %v1509
      %v1512 = vmul.f32 %v1511, %v1509
      %v1513 = vmul.f32 %v1512, %v1511
      %v1514 = vmul.f32 0.5, %v1513
      %v1515 = vsub.f32 1.5, %v1514
      %v1516 = vmul.f32 %v1511, %v1515
      %vm1517 = vweird.f32 %v1509
      %vm1518 = vweird.f32 %v1511
      %vm1519 = vmor %vm1517, %vm1518
      %v1520 = vsel %vm1519, %v1511, %v1516
      %v1521 = vrsqrt.pop %v1510
      %v1522 = vmul.f32 %v1521, %v1510
      %v1523 = vmul.f32 %v1522, %v1521
      %v1524 = vmul.f32 0.5, %v1523
      %v1525 = vsub.f32 1.5, %v1524
      %v1526 = vmul.f32 %v1521, %v1525
      %vm1527 = vweird.f32 %v1510
      %vm1528 = vweird.f32 %v1521
      %vm1529 = vmor %vm1527, %vm1528
      %v1530 = vsel %vm1529, %v1521, %v1526
      %v1531 = vmul.f32 %v1493, %v1520
      %v1532 = vmul.f32 %v1494, %v1520
      %v1533 = vmul.f32 %v1495, %v1530
      %v1534 = vmul.f32 %v1496, %v1530
      %v1535 = vld [vmem:[%s4 + $0x60] sm:$0xff]
      %v1536 = vld [vmem:[%s4 + $0x68] sm:$0xff]
      %1538 = vset.pattern.permute.xlu0 0
      %1539 = vperm.xlu0 %1538, %v1535
      %v1540 = vpop.permute.xlu0 %1539
      %1543 = vset.pattern.permute.xlu0 0
      %1544 = vperm.xlu0 %1543, %v1536
      %v1545 = vpop.permute.xlu0 %1544
      %v1547 = vmul.f32 %v1531, %v1540
      %v1548 = vmul.f32 %v1532, %v1540
      %v1549 = vmul.f32 %v1533, %v1545
      %v1550 = vmul.f32 %v1534, %v1545
      %v1551 = vld [vmem:[%s4 + $0x70] sm:$0xff]
      %v1552 = vld [vmem:[%s4 + $0x78] sm:$0xff]
      %1554 = vset.pattern.permute.xlu0 0
      %1555 = vperm.xlu0 %1554, %v1551
      %v1556 = vpop.permute.xlu0 %1555
      %1559 = vset.pattern.permute.xlu0 0
      %1560 = vperm.xlu0 %1559, %v1552
      %v1561 = vpop.permute.xlu0 %1560
      %v1563 = vadd.f32 %v1547, %v1556
      %v1564 = vadd.f32 %v1548, %v1556
      %v1565 = vadd.f32 %v1549, %v1561
      %v1566 = vadd.f32 %v1550, %v1561
      %1567 = vrot.lane.b32.xlu0 %v1164, 17
      %v1568 = vpop.permute.xlu0 %1567
      %1569 = vrot.lane.b32.xlu0 %v1166, 17
      %v1570 = vpop.permute.xlu0 %1569
      %1571 = vrot.lane.b32.xlu0 %v1192, 17
      %v1572 = vpop.permute.xlu0 %1571
      %1573 = vrot.lane.b32.xlu0 %v1194, 17
      %v1574 = vpop.permute.xlu0 %1573
      %v1575 = vsel %vm479, %v1568, %v1572
      %v1576 = vsel %vm479, %v1570, %v1574
      %v1577 = vsel %vm479, %v1572, %v1568
      %v1578 = vsel %vm479, %v1574, %v1570
      %v1579 = vmul.f32 %v1577, %v486
      %v1580 = vmul.f32 %v1575, %v487
      %v1581 = vmul.f32 %v1578, %v486
      %v1582 = vmul.f32 %v1576, %v487
      %v1583 = vpack.c.bf16 %v1580, %v1579
      %v1584 = vpack.c.bf16 %v1582, %v1581
      %1585 = vrot.lane.b32.xlu0 %v1164, 16
      %v1586 = vpop.permute.xlu0 %1585
      %1587 = vrot.lane.b32.xlu0 %v1166, 16
      %v1588 = vpop.permute.xlu0 %1587
      %1589 = vrot.lane.b32.xlu0 %v1192, 16
      %v1590 = vpop.permute.xlu0 %1589
      %1591 = vrot.lane.b32.xlu0 %v1194, 16
      %v1592 = vpop.permute.xlu0 %1591
      %v1593 = vsel %vm504, %v1586, %v1590
      %v1594 = vsel %vm504, %v1588, %v1592
      %v1595 = vsel %vm504, %v1590, %v1586
      %v1596 = vsel %vm504, %v1592, %v1588
      %v1597 = vmul.f32 %v1595, %v512
      %v1598 = vmul.f32 %v1593, %v513
      %v1599 = vmul.f32 %v1596, %v512
      %v1600 = vmul.f32 %v1594, %v513
      %v1601 = vpack.c.bf16 %v1598, %v1597
      %v1602 = vpack.c.bf16 %v1600, %v1599
      %1603 = vrot.lane.b32.xlu0 %v1164, 15
      %v1604 = vpop.permute.xlu0 %1603
      %1605 = vrot.lane.b32.xlu0 %v1166, 15
      %v1606 = vpop.permute.xlu0 %1605
      %1607 = vrot.lane.b32.xlu0 %v1192, 15
      %v1608 = vpop.permute.xlu0 %1607
      %1609 = vrot.lane.b32.xlu0 %v1194, 15
      %v1610 = vpop.permute.xlu0 %1609
      %v1611 = vsel %vm530, %v1604, %v1608
      %v1612 = vsel %vm530, %v1606, %v1610
      %v1613 = vsel %vm530, %v1608, %v1604
      %v1614 = vsel %vm530, %v1610, %v1606
      %v1615 = vmul.f32 %v1613, %v538
      %v1616 = vmul.f32 %v1611, %v539
      %v1617 = vmul.f32 %v1614, %v538
      %v1618 = vmul.f32 %v1612, %v539
      %v1619 = vpack.c.bf16 %v1616, %v1615
      %v1620 = vpack.c.bf16 %v1618, %v1617
      %1621 = vrot.lane.b32.xlu0 %v1164, 1
      %v1622 = vpop.permute.xlu0 %1621
      %1623 = vrot.lane.b32.xlu0 %v1166, 1
      %v1624 = vpop.permute.xlu0 %1623
      %1625 = vrot.lane.b32.xlu0 %v1192, 1
      %v1626 = vpop.permute.xlu0 %1625
      %1627 = vrot.lane.b32.xlu0 %v1194, 1
      %v1628 = vpop.permute.xlu0 %1627
      %v1629 = vsel %vm556, %v1622, %v1626
      %v1630 = vsel %vm556, %v1624, %v1628
      %v1631 = vsel %vm556, %v1626, %v1622
      %v1632 = vsel %vm556, %v1628, %v1624
      %v1633 = vmul.f32 %v1631, %v564
      %v1634 = vmul.f32 %v1629, %v565
      %v1635 = vmul.f32 %v1632, %v564
      %v1636 = vmul.f32 %v1630, %v565
      %v1637 = vpack.c.bf16 %v1634, %v1633
      %v1638 = vpack.c.bf16 %v1636, %v1635
      %v1639 = vpack.c.bf16 %v1192, %v1164
      %v1640 = vpack.c.bf16 %v1194, %v1166
      %1641 = vrot.lane.b32.xlu0 %v1164, 127
      %v1642 = vpop.permute.xlu0 %1641
      %1643 = vrot.lane.b32.xlu0 %v1166, 127
      %v1644 = vpop.permute.xlu0 %1643
      %1645 = vrot.lane.b32.xlu0 %v1192, 127
      %v1646 = vpop.permute.xlu0 %1645
      %1647 = vrot.lane.b32.xlu0 %v1194, 127
      %v1648 = vpop.permute.xlu0 %1647
      %v1649 = vsel %vm584, %v1642, %v1646
      %v1650 = vsel %vm584, %v1644, %v1648
      %v1651 = vsel %vm584, %v1646, %v1642
      %v1652 = vsel %vm584, %v1648, %v1644
      %v1653 = vmul.f32 %v1649, %v592
      %v1654 = vmul.f32 %v1651, %v593
      %v1655 = vmul.f32 %v1650, %v592
      %v1656 = vmul.f32 %v1652, %v593
      %v1657 = vpack.c.bf16 %v1654, %v1653
      %v1658 = vpack.c.bf16 %v1656, %v1655
      %1659 = vrot.lane.b32.xlu0 %v1164, 113
      %v1660 = vpop.permute.xlu0 %1659
      %1661 = vrot.lane.b32.xlu0 %v1166, 113
      %v1662 = vpop.permute.xlu0 %1661
      %1663 = vrot.lane.b32.xlu0 %v1192, 113
      %v1664 = vpop.permute.xlu0 %1663
      %1665 = vrot.lane.b32.xlu0 %v1194, 113
      %v1666 = vpop.permute.xlu0 %1665
      %v1667 = vsel %vm610, %v1660, %v1664
      %v1668 = vsel %vm610, %v1662, %v1666
      %v1669 = vsel %vm610, %v1664, %v1660
      %v1670 = vsel %vm610, %v1666, %v1662
      %v1671 = vmul.f32 %v1667, %v618
      %v1672 = vmul.f32 %v1669, %v619
      %v1673 = vmul.f32 %v1668, %v618
      %v1674 = vmul.f32 %v1670, %v619
      %v1675 = vpack.c.bf16 %v1672, %v1671
      %v1676 = vpack.c.bf16 %v1674, %v1673
      %1677 = vrot.lane.b32.xlu0 %v1164, 112
      %v1678 = vpop.permute.xlu0 %1677
      %1679 = vrot.lane.b32.xlu0 %v1166, 112
      %v1680 = vpop.permute.xlu0 %1679
      %1681 = vrot.lane.b32.xlu0 %v1192, 112
      %v1682 = vpop.permute.xlu0 %1681
      %1683 = vrot.lane.b32.xlu0 %v1194, 112
      %v1684 = vpop.permute.xlu0 %1683
      %v1685 = vsel %vm636, %v1678, %v1682
      %v1686 = vsel %vm636, %v1680, %v1684
      %v1687 = vsel %vm636, %v1682, %v1678
      %v1688 = vsel %vm636, %v1684, %v1680
      %v1689 = vmul.f32 %v1685, %v644
      %v1690 = vmul.f32 %v1687, %v645
      %v1691 = vmul.f32 %v1686, %v644
      %v1692 = vmul.f32 %v1688, %v645
      %v1693 = vpack.c.bf16 %v1690, %v1689
      %v1694 = vpack.c.bf16 %v1692, %v1691
      %1695 = vrot.lane.b32.xlu0 %v1164, 111
      %v1696 = vpop.permute.xlu0 %1695
      %1697 = vrot.lane.b32.xlu0 %v1166, 111
      %v1698 = vpop.permute.xlu0 %1697
      %1699 = vrot.lane.b32.xlu0 %v1192, 111
      %v1700 = vpop.permute.xlu0 %1699
      %1701 = vrot.lane.b32.xlu0 %v1194, 111
      %v1702 = vpop.permute.xlu0 %1701
      %v1703 = vsel %vm662, %v1696, %v1700
      %v1704 = vsel %vm662, %v1698, %v1702
      %v1705 = vsel %vm662, %v1700, %v1696
      %v1706 = vsel %vm662, %v1702, %v1698
      %v1707 = vmul.f32 %v1703, %v670
      %v1708 = vmul.f32 %v1705, %v671
      %v1709 = vmul.f32 %v1704, %v670
      %v1710 = vmul.f32 %v1706, %v671
      %v1711 = vpack.c.bf16 %v1708, %v1707
      %v1712 = vpack.c.bf16 %v1710, %v1709
      %v1715 = vunpack.c.l.b16 %v1583
      %v1716 = vunpack.c.h.b16 %v1583
      %v1717 = vunpack.c.l.b16 %v1584
      %v1718 = vunpack.c.h.b16 %v1584
      %v1719 = vpack.c.b16 %v1717, %v1715
      %v1720 = vpack.c.b16 %v1718, %v1716
      %v1725 = vunpack.c.l.b16 %v1601
      %v1726 = vunpack.c.h.b16 %v1601
      %v1727 = vunpack.c.l.b16 %v1602
      %v1728 = vunpack.c.h.b16 %v1602
      %v1729 = vpack.c.b16 %v1727, %v1725
      %v1730 = vpack.c.b16 %v1728, %v1726
      %v1735 = vunpack.c.l.b16 %v1619
      %v1736 = vunpack.c.h.b16 %v1619
      %v1737 = vunpack.c.l.b16 %v1620
      %v1738 = vunpack.c.h.b16 %v1620
      %v1739 = vpack.c.b16 %v1737, %v1735
      %v1740 = vpack.c.b16 %v1738, %v1736
      %v1745 = vunpack.c.l.b16 %v1637
      %v1746 = vunpack.c.h.b16 %v1637
      %v1747 = vunpack.c.l.b16 %v1638
      %v1748 = vunpack.c.h.b16 %v1638
      %v1749 = vpack.c.b16 %v1747, %v1745
      %v1750 = vpack.c.b16 %v1748, %v1746
      %v1755 = vunpack.c.l.b16 %v1639
      %v1756 = vunpack.c.h.b16 %v1639
      %v1757 = vunpack.c.l.b16 %v1640
      %v1758 = vunpack.c.h.b16 %v1640
      %v1759 = vpack.c.b16 %v1757, %v1755
      %v1760 = vpack.c.b16 %v1758, %v1756
      %v1765 = vunpack.c.l.b16 %v1657
      %v1766 = vunpack.c.h.b16 %v1657
      %v1767 = vunpack.c.l.b16 %v1658
      %v1768 = vunpack.c.h.b16 %v1658
      %v1769 = vpack.c.b16 %v1767, %v1765
      %v1770 = vpack.c.b16 %v1768, %v1766
      %v1775 = vunpack.c.l.b16 %v1675
      %v1776 = vunpack.c.h.b16 %v1675
      %v1777 = vunpack.c.l.b16 %v1676
      %v1778 = vunpack.c.h.b16 %v1676
      %v1779 = vpack.c.b16 %v1777, %v1775
      %v1780 = vpack.c.b16 %v1778, %v1776
      %v1785 = vunpack.c.l.b16 %v1693
      %v1786 = vunpack.c.h.b16 %v1693
      %v1787 = vunpack.c.l.b16 %v1694
      %v1788 = vunpack.c.h.b16 %v1694
      %v1789 = vpack.c.b16 %v1787, %v1785
      %v1790 = vpack.c.b16 %v1788, %v1786
      %v1795 = vunpack.c.l.b16 %v1711
      %v1796 = vunpack.c.h.b16 %v1711
      %v1797 = vunpack.c.l.b16 %v1712
      %v1798 = vunpack.c.h.b16 %v1712
      %v1799 = vpack.c.b16 %v1797, %v1795
      %v1800 = vpack.c.b16 %v1798, %v1796
      %s1803 = scalar_lea.vmem %s2, 32
      %v1804 = vld [vmem:[%s1803] sm:$0xff]
      %v1805 = vld [vmem:[%s1803 + $0x8] sm:$0xff]
      %v1806 = vld [vmem:[%s4 + $0x50] sm:$0xff]
      %v1807 = vld [vmem:[%s4 + $0x58] sm:$0xff]
      %1809 = vset.pattern.permute.xlu0 0
      %1810 = vperm.xlu0 %1809, %v1806
      %v1811 = vpop.permute.xlu0 %1810
      %1814 = vset.pattern.permute.xlu0 0
      %1815 = vperm.xlu0 %1814, %v1807
      %v1816 = vpop.permute.xlu0 %1815
      %v1820 = vunpack.c.l.b16 %v1804
      %v1821 = vunpack.c.h.b16 %v1804
      %v1822 = vunpack.c.l.b16 %v1805
      %v1823 = vunpack.c.h.b16 %v1805
      %v1824 = vpack.c.b16 %v1822, %v1820
      %v1825 = vpack.c.b16 %v1823, %v1821
      %v1828 = vsel %vm781, %v1825, 0
      %1830 = vmatpush.bf16.msra.mxu0 %v1789
      %1831 = vmatpush.bf16.msra.mxu0 %v1779
      %1832 = vmatpush.bf16.msra.mxu0 %v1769
      %1833 = vmatpush.bf16.msra.mxu0 %v1759
      %1834 = vmatpush.bf16.msra.mxu0 %v1749
      %1835 = vmatpush.bf16.msra.mxu0 %v1739
      %1836 = vmatpush.bf16.msra.mxu0 %v1729
      %1837 = vmatpush.bf16.msra.mxu0 %v1719
      %1838 = vmatmul.bf16.gmra.mxu0 %v1824
      %v1839 = vpop.f32.mrf.mxu0
      %v1840 = vadd.f32 %v1811, %v1839
      %v1841 = vpop.f32.mrf.mxu0
      %v1842 = vadd.f32 %v1816, %v1841
      %1843 = vdwg.mxu0
      %1844 = vmatpush.bf16.msra.mxu0 0
      %1845 = vmatpush.bf16.msra.mxu0 0
      %1846 = vmatpush.bf16.msra.mxu0 0
      %1847 = vmatpush.bf16.msra.mxu0 0
      %1848 = vmatpush.bf16.msra.mxu0 0
      %1849 = vmatpush.bf16.msra.mxu0 0
      %1850 = vmatpush.bf16.msra.mxu0 0
      %1851 = vmatpush.bf16.msra.mxu0 %v1799
      %1852 = vmatmul.bf16.gmra.mxu0 %v1828
      %v1853 = vpop.f32.mrf.mxu0
      %v1854 = vadd.f32 %v1840, %v1853
      %v1855 = vpop.f32.mrf.mxu0
      %v1856 = vadd.f32 %v1842, %v1855
      %1857 = vdwg.mxu0
      %1858 = vmatpush.bf16.msra.mxu0 %v1790
      %1859 = vmatpush.bf16.msra.mxu0 %v1780
      %1860 = vmatpush.bf16.msra.mxu0 %v1770
      %1861 = vmatpush.bf16.msra.mxu0 %v1760
      %1862 = vmatpush.bf16.msra.mxu0 %v1750
      %1863 = vmatpush.bf16.msra.mxu0 %v1740
      %1864 = vmatpush.bf16.msra.mxu0 %v1730
      %1865 = vmatpush.bf16.msra.mxu0 %v1720
      %1866 = vmatmul.bf16.gmra.mxu0 %v1824
      %v1867 = vpop.f32.mrf.mxu0
      %v1868 = vadd.f32 %v1811, %v1867
      %v1869 = vpop.f32.mrf.mxu0
      %v1870 = vadd.f32 %v1816, %v1869
      %1871 = vdwg.mxu0
      %1872 = vmatpush.bf16.msra.mxu0 0
      %1873 = vmatpush.bf16.msra.mxu0 0
      %1874 = vmatpush.bf16.msra.mxu0 0
      %1875 = vmatpush.bf16.msra.mxu0 0
      %1876 = vmatpush.bf16.msra.mxu0 0
      %1877 = vmatpush.bf16.msra.mxu0 0
      %1878 = vmatpush.bf16.msra.mxu0 0
      %1879 = vmatpush.bf16.msra.mxu0 %v1800
      %1880 = vmatmul.bf16.gmra.mxu0 %v1828
      %v1881 = vpop.f32.mrf.mxu0
      %v1882 = vadd.f32 %v1868, %v1881
      %v1883 = vpop.f32.mrf.mxu0
      %v1884 = vadd.f32 %v1870, %v1883
      %1885 = vdwg.mxu0
      %v1886 = vld [vmem:[%s10] sm:$0xff]
      %v1887 = vld [vmem:[%s10 + $0x8] sm:$0xff]
      %v1888 = vadd.f32 %v1563, %v1564
      %1889 = vadd.xlane.f32.xlu0 %v1888
      %v1890 = vpop.xlane.xlu0 %1889
      %v1891 = vadd.f32 %v1565, %v1566
      %1892 = vadd.xlane.f32.xlu0 %v1891
      %v1893 = vpop.xlane.xlu0 %1892
      %v1894 = vmul.f32 %v1890, %v1490
      %v1895 = vmul.f32 %v1893, %v1490
      %v1896 = vadd.f32 %v1854, %v1882
      %1897 = vadd.xlane.f32.xlu0 %v1896
      %v1898 = vpop.xlane.xlu0 %1897
      %v1899 = vadd.f32 %v1856, %v1884
      %1900 = vadd.xlane.f32.xlu0 %v1899
      %v1901 = vpop.xlane.xlu0 %1900
      %v1902 = vmul.f32 %v1898, %v1490
      %v1903 = vmul.f32 %v1901, %v1490
      %v1905 = vsel %vm781, %v1886, 0
      %v1908 = vsel %vm781, %v1887, 0
      %1910 = vmatpush.msra.mxu0 0.0
      %1911 = vmatpush.msra.mxu0 0.0
      %1912 = vmatpush.msra.mxu0 0.0
      %1913 = vmatpush.msra.mxu0 0.0
      %1914 = vmatpush.msra.mxu0 0.0
      %1915 = vmatpush.msra.mxu0 0.0
      %1916 = vmatpush.msra.mxu0 0.0
      %1917 = vmatpush.msra.mxu0 0.0
      %1918 = vmatpush.msra.mxu0 0.0
      %1919 = vmatpush.msra.mxu0 0.0
      %1920 = vmatpush.msra.mxu0 0.0
      %1921 = vmatpush.msra.mxu0 0.0
      %1922 = vmatpush.msra.mxu0 0.0
      %1923 = vmatpush.msra.mxu0 0.0
      %1924 = vmatpush.msra.mxu0 %v1895
      %1925 = vmatpush.msra.mxu0 %v1894
      %1926 = vmatmul.f32.gmra.mxu0 %v1905
      %v1927 = vpop.f32.mrf.mxu0
      %v1928 = vadd.f32 0.0, %v1927
      %1929 = vmatmul.f32.gmra.mxu0 %v1908
      %v1930 = vpop.f32.mrf.mxu0
      %v1931 = vadd.f32 0.0, %v1930
      %1932 = vdwg.mxu0
      %v1933 = vmul.f32 %v1928, 0.5
      %v1934 = vmul.f32 %v1931, 0.5
      %v1935 = vsub.f32 %v1894, %v1933
      %v1936 = vsub.f32 %v1895, %v1934
      %v1937 = vmul.f32 %v1935, 1.442695
      %v1938 = vpow.pop %v1937
      %v1939 = vmul.f32 %v1936, 1.442695
      %v1940 = vpow.pop %v1939
      %1941 = vmatpush.msra.mxu0 0.0
      %1942 = vmatpush.msra.mxu0 0.0
      %1943 = vmatpush.msra.mxu0 0.0
      %1944 = vmatpush.msra.mxu0 0.0
      %1945 = vmatpush.msra.mxu0 0.0
      %1946 = vmatpush.msra.mxu0 0.0
      %1947 = vmatpush.msra.mxu0 0.0
      %1948 = vmatpush.msra.mxu0 0.0
      %1949 = vmatpush.msra.mxu0 0.0
      %1950 = vmatpush.msra.mxu0 0.0
      %1951 = vmatpush.msra.mxu0 0.0
      %1952 = vmatpush.msra.mxu0 0.0
      %1953 = vmatpush.msra.mxu0 0.0
      %1954 = vmatpush.msra.mxu0 0.0
      %1955 = vmatpush.msra.mxu0 %v1940
      %1956 = vmatpush.msra.mxu0 %v1938
      %1957 = vmatmul.f32.gmra.mxu0 %v1905
      %v1958 = vpop.f32.mrf.mxu0
      %v1959 = vadd.f32 0.0, %v1958
      %1960 = vmatmul.f32.gmra.mxu0 %v1908
      %v1961 = vpop.f32.mrf.mxu0
      %v1962 = vadd.f32 0.0, %v1961
      %1963 = vdwg.mxu0
      %v1964 = vrcp.pop %v1959
      %v1965 = vmul.f32 %v1959, %v1964
      %v1966 = vsub.f32 1.0, %v1965
      %v1967 = vmul.f32 %v1964, %v1966
      %v1968 = vadd.f32 %v1964, %v1967
      %vm1969 = vweird.f32 %v1959
      %vm1970 = vweird.f32 %v1964
      %vm1971 = vmor %vm1969, %vm1970
      %v1972 = vsel %vm1971, %v1964, %v1968
      %v1973 = vand.u32 2147483647, %v1959
      %vm1974 = vcmp.eq.f32.partialorder %v1973, 8.507059e+37
      %v1975 = vand.u32 %v1959, 2147483648
      %v1976 = vor.u32 1.1754944e-38, %v1975
      %v1977 = vsel %vm1974, %v1976, %v1972
      %v1978 = vmul.f32 %v1938, %v1977
      %v1979 = vrcp.pop %v1962
      %v1980 = vmul.f32 %v1962, %v1979
      %v1981 = vsub.f32 1.0, %v1980
      %v1982 = vmul.f32 %v1979, %v1981
      %v1983 = vadd.f32 %v1979, %v1982
      %vm1984 = vweird.f32 %v1962
      %vm1985 = vweird.f32 %v1979
      %vm1986 = vmor %vm1984, %vm1985
      %v1987 = vsel %vm1986, %v1979, %v1983
      %v1988 = vand.u32 2147483647, %v1962
      %vm1989 = vcmp.eq.f32.partialorder %v1988, 8.507059e+37
      %v1990 = vand.u32 %v1962, 2147483648
      %v1991 = vor.u32 1.1754944e-38, %v1990
      %v1992 = vsel %vm1989, %v1991, %v1987
      %v1993 = vmul.f32 %v1940, %v1992
      %1994 = vmatpush.msra.mxu0 0.0
      %1995 = vmatpush.msra.mxu0 0.0
      %1996 = vmatpush.msra.mxu0 0.0
      %1997 = vmatpush.msra.mxu0 0.0
      %1998 = vmatpush.msra.mxu0 0.0
      %1999 = vmatpush.msra.mxu0 0.0
      %2000 = vmatpush.msra.mxu0 0.0
      %2001 = vmatpush.msra.mxu0 0.0
      %2002 = vmatpush.msra.mxu0 0.0
      %2003 = vmatpush.msra.mxu0 0.0
      %2004 = vmatpush.msra.mxu0 0.0
      %2005 = vmatpush.msra.mxu0 0.0
      %2006 = vmatpush.msra.mxu0 0.0
      %2007 = vmatpush.msra.mxu0 0.0
      %2008 = vmatpush.msra.mxu0 %v1903
      %2009 = vmatpush.msra.mxu0 %v1902
      %2010 = vmatmul.f32.gmra.mxu0 %v1905
      %v2011 = vpop.f32.mrf.mxu0
      %v2012 = vadd.f32 0.0, %v2011
      %2013 = vmatmul.f32.gmra.mxu0 %v1908
      %v2014 = vpop.f32.mrf.mxu0
      %v2015 = vadd.f32 0.0, %v2014
      %2016 = vdwg.mxu0
      %v2017 = vmul.f32 %v2012, 0.5
      %v2018 = vmul.f32 %v2015, 0.5
      %v2019 = vsub.f32 %v1902, %v2017
      %v2020 = vsub.f32 %v1903, %v2018
      %v2021 = vmul.f32 %v2019, 1.442695
      %v2022 = vpow.pop %v2021
      %v2023 = vmul.f32 %v2020, 1.442695
      %v2024 = vpow.pop %v2023
      %2025 = vmatpush.msra.mxu0 0.0
      %2026 = vmatpush.msra.mxu0 0.0
      %2027 = vmatpush.msra.mxu0 0.0
      %2028 = vmatpush.msra.mxu0 0.0
      %2029 = vmatpush.msra.mxu0 0.0
      %2030 = vmatpush.msra.mxu0 0.0
      %2031 = vmatpush.msra.mxu0 0.0
      %2032 = vmatpush.msra.mxu0 0.0
      %2033 = vmatpush.msra.mxu0 0.0
      %2034 = vmatpush.msra.mxu0 0.0
      %2035 = vmatpush.msra.mxu0 0.0
      %2036 = vmatpush.msra.mxu0 0.0
      %2037 = vmatpush.msra.mxu0 0.0
      %2038 = vmatpush.msra.mxu0 0.0
      %2039 = vmatpush.msra.mxu0 %v2024
      %2040 = vmatpush.msra.mxu0 %v2022
      %2041 = vmatmul.f32.gmra.mxu0 %v1905
      %v2042 = vpop.f32.mrf.mxu0
      %v2043 = vadd.f32 0.0, %v2042
      %2044 = vmatmul.f32.gmra.mxu0 %v1908
      %v2045 = vpop.f32.mrf.mxu0
      %v2046 = vadd.f32 0.0, %v2045
      %2047 = vdwg.mxu0
      %v2048 = vrcp.pop %v2043
      %v2049 = vmul.f32 %v2043, %v2048
      %v2050 = vsub.f32 1.0, %v2049
      %v2051 = vmul.f32 %v2048, %v2050
      %v2052 = vadd.f32 %v2048, %v2051
      %vm2053 = vweird.f32 %v2043
      %vm2054 = vweird.f32 %v2048
      %vm2055 = vmor %vm2053, %vm2054
      %v2056 = vsel %vm2055, %v2048, %v2052
      %v2057 = vand.u32 2147483647, %v2043
      %vm2058 = vcmp.eq.f32.partialorder %v2057, 8.507059e+37
      %v2059 = vand.u32 %v2043, 2147483648
      %v2060 = vor.u32 1.1754944e-38, %v2059
      %v2061 = vsel %vm2058, %v2060, %v2056
      %v2062 = vmul.f32 %v2022, %v2061
      %v2063 = vrcp.pop %v2046
      %v2064 = vmul.f32 %v2046, %v2063
      %v2065 = vsub.f32 1.0, %v2064
      %v2066 = vmul.f32 %v2063, %v2065
      %v2067 = vadd.f32 %v2063, %v2066
      %vm2068 = vweird.f32 %v2046
      %vm2069 = vweird.f32 %v2063
      %vm2070 = vmor %vm2068, %vm2069
      %v2071 = vsel %vm2070, %v2063, %v2067
      %v2072 = vand.u32 2147483647, %v2046
      %vm2073 = vcmp.eq.f32.partialorder %v2072, 8.507059e+37
      %v2074 = vand.u32 %v2046, 2147483648
      %v2075 = vor.u32 1.1754944e-38, %v2074
      %v2076 = vsel %vm2073, %v2075, %v2071
      %v2077 = vmul.f32 %v2024, %v2076
      %2079 = vset.pattern.permute.xlu0 0
      %2080 = vperm.xlu0 %2079, %v1978
      %v2081 = vpop.permute.xlu0 %2080
      %2084 = vset.pattern.permute.xlu0 0
      %2085 = vperm.xlu0 %2084, %v1993
      %v2086 = vpop.permute.xlu0 %2085
      %v2088 = vmul.f32 %v2081, %v1854
      %v2089 = vmul.f32 %v2081, %v1882
      %v2090 = vmul.f32 %v2086, %v1856
      %v2091 = vmul.f32 %v2086, %v1884
      %2093 = vset.pattern.permute.xlu0 0
      %2094 = vperm.xlu0 %2093, %v2062
      %v2095 = vpop.permute.xlu0 %2094
      %2098 = vset.pattern.permute.xlu0 0
      %2099 = vperm.xlu0 %2098, %v2077
      %v2100 = vpop.permute.xlu0 %2099
      %v2102 = vmul.f32 %v2095, %v1563
      %v2103 = vmul.f32 %v2095, %v1564
      %v2104 = vmul.f32 %v2100, %v1565
      %v2105 = vmul.f32 %v2100, %v1566
      %v2106 = vadd.f32 %v2088, %v2102
      %v2107 = vadd.f32 %v2089, %v2103
      %v2108 = vadd.f32 %v2090, %v2104
      %v2109 = vadd.f32 %v2091, %v2105
      %2110 = vmatpush.msra.mxu0 0.0
      %2111 = vmatpush.msra.mxu0 0.0
      %2112 = vmatpush.msra.mxu0 0.0
      %2113 = vmatpush.msra.mxu0 0.0
      %2114 = vmatpush.msra.mxu0 0.0
      %2115 = vmatpush.msra.mxu0 0.0
      %2116 = vmatpush.msra.mxu0 0.0
      %2117 = vmatpush.msra.mxu0 0.0
      %2118 = vmatpush.msra.mxu0 0.0
      %2119 = vmatpush.msra.mxu0 0.0
      %2120 = vmatpush.msra.mxu0 0.0
      %2121 = vmatpush.msra.mxu0 0.0
      %2122 = vmatpush.msra.mxu0 0.0
      %2123 = vmatpush.msra.mxu0 0.0
      %2124 = vmatpush.msra.mxu0 %v2108
      %2125 = vmatpush.msra.mxu0 %v2106
      %2126 = vmatmul.f32.gmra.mxu0 %v1905
      %v2127 = vpop.f32.mrf.mxu0
      %v2128 = vadd.f32 0.0, %v2127
      %2129 = vmatmul.f32.gmra.mxu0 %v1908
      %v2130 = vpop.f32.mrf.mxu0
      %v2131 = vadd.f32 0.0, %v2130
      %2132 = vdwg.mxu0
      %2133 = vmatpush.msra.mxu0 0.0
      %2134 = vmatpush.msra.mxu0 0.0
      %2135 = vmatpush.msra.mxu0 0.0
      %2136 = vmatpush.msra.mxu0 0.0
      %2137 = vmatpush.msra.mxu0 0.0
      %2138 = vmatpush.msra.mxu0 0.0
      %2139 = vmatpush.msra.mxu0 0.0
      %2140 = vmatpush.msra.mxu0 0.0
      %2141 = vmatpush.msra.mxu0 0.0
      %2142 = vmatpush.msra.mxu0 0.0
      %2143 = vmatpush.msra.mxu0 0.0
      %2144 = vmatpush.msra.mxu0 0.0
      %2145 = vmatpush.msra.mxu0 0.0
      %2146 = vmatpush.msra.mxu0 0.0
      %2147 = vmatpush.msra.mxu0 %v2109
      %2148 = vmatpush.msra.mxu0 %v2107
      %2149 = vmatmul.f32.gmra.mxu0 %v1905
      %v2150 = vpop.f32.mrf.mxu0
      %v2151 = vadd.f32 0.0, %v2150
      %2152 = vmatmul.f32.gmra.mxu0 %v1908
      %v2153 = vpop.f32.mrf.mxu0
      %v2154 = vadd.f32 0.0, %v2153
      %2155 = vdwg.mxu0
      %v2156 = vxor.u32 %v2128, 2147483648
      %v2157 = vxor.u32 %v2151, 2147483648
      %v2158 = vxor.u32 %v2131, 2147483648
      %v2159 = vxor.u32 %v2154, 2147483648
      %v2160 = vmul.f32 %v2156, 1.442695
      %v2161 = vpow.pop %v2160
      %v2162 = vmul.f32 %v2157, 1.442695
      %v2163 = vpow.pop %v2162
      %v2164 = vmul.f32 %v2158, 1.442695
      %v2165 = vpow.pop %v2164
      %v2166 = vmul.f32 %v2159, 1.442695
      %v2167 = vpow.pop %v2166
      %v2168 = vadd.f32 %v2161, 1.0
      %v2169 = vadd.f32 %v2163, 1.0
      %v2170 = vadd.f32 %v2165, 1.0
      %v2171 = vadd.f32 %v2167, 1.0
      %v2172 = vrcp.pop %v2168
      %v2173 = vmul.f32 %v2168, %v2172
      %v2174 = vsub.f32 1.0, %v2173
      %v2175 = vmul.f32 %v2172, %v2174
      %v2176 = vadd.f32 %v2172, %v2175
      %vm2177 = vweird.f32 %v2168
      %vm2178 = vweird.f32 %v2172
      %vm2179 = vmor %vm2177, %vm2178
      %v2180 = vsel %vm2179, %v2172, %v2176
      %v2181 = vand.u32 2147483647, %v2168
      %vm2182 = vcmp.eq.f32.partialorder %v2181, 8.507059e+37
      %v2183 = vand.u32 %v2168, 2147483648
      %v2184 = vor.u32 1.1754944e-38, %v2183
      %v2185 = vsel %vm2182, %v2184, %v2180
      %v2186 = vmul.f32 1.0, %v2185
      %v2187 = vrcp.pop %v2169
      %v2188 = vmul.f32 %v2169, %v2187
      %v2189 = vsub.f32 1.0, %v2188
      %v2190 = vmul.f32 %v2187, %v2189
      %v2191 = vadd.f32 %v2187, %v2190
      %vm2192 = vweird.f32 %v2169
      %vm2193 = vweird.f32 %v2187
      %vm2194 = vmor %vm2192, %vm2193
      %v2195 = vsel %vm2194, %v2187, %v2191
      %v2196 = vand.u32 2147483647, %v2169
      %vm2197 = vcmp.eq.f32.partialorder %v2196, 8.507059e+37
      %v2198 = vand.u32 %v2169, 2147483648
      %v2199 = vor.u32 1.1754944e-38, %v2198
      %v2200 = vsel %vm2197, %v2199, %v2195
      %v2201 = vmul.f32 1.0, %v2200
      %v2202 = vrcp.pop %v2170
      %v2203 = vmul.f32 %v2170, %v2202
      %v2204 = vsub.f32 1.0, %v2203
      %v2205 = vmul.f32 %v2202, %v2204
      %v2206 = vadd.f32 %v2202, %v2205
      %vm2207 = vweird.f32 %v2170
      %vm2208 = vweird.f32 %v2202
      %vm2209 = vmor %vm2207, %vm2208
      %v2210 = vsel %vm2209, %v2202, %v2206
      %v2211 = vand.u32 2147483647, %v2170
      %vm2212 = vcmp.eq.f32.partialorder %v2211, 8.507059e+37
      %v2213 = vand.u32 %v2170, 2147483648
      %v2214 = vor.u32 1.1754944e-38, %v2213
      %v2215 = vsel %vm2212, %v2214, %v2210
      %v2216 = vmul.f32 1.0, %v2215
      %v2217 = vrcp.pop %v2171
      %v2218 = vmul.f32 %v2171, %v2217
      %v2219 = vsub.f32 1.0, %v2218
      %v2220 = vmul.f32 %v2217, %v2219
      %v2221 = vadd.f32 %v2217, %v2220
      %vm2222 = vweird.f32 %v2171
      %vm2223 = vweird.f32 %v2217
      %vm2224 = vmor %vm2222, %vm2223
      %v2225 = vsel %vm2224, %v2217, %v2221
      %v2226 = vand.u32 2147483647, %v2171
      %vm2227 = vcmp.eq.f32.partialorder %v2226, 8.507059e+37
      %v2228 = vand.u32 %v2171, 2147483648
      %v2229 = vor.u32 1.1754944e-38, %v2228
      %v2230 = vsel %vm2227, %v2229, %v2225
      %v2231 = vmul.f32 1.0, %v2230
      %v2232 = vmul.f32 %v1164, %v2186
      %v2233 = vmul.f32 %v1192, %v2201
      %v2234 = vmul.f32 %v1166, %v2216
      %v2235 = vmul.f32 %v1194, %v2231
      %v2236 = vld [vmem:[#allocation2] sm:$0xff]
      %v2237 = vld [vmem:[#allocation2 + $0x8] sm:$0xff]
      %v2238 = vld [vmem:[#allocation2 + $0x10] sm:$0xff]
      %v2239 = vld [vmem:[#allocation2 + $0x18] sm:$0xff]
      %v2240 = vadd.f32 %v2236, %v2232
      %v2241 = vadd.f32 %v2237, %v2233
      %v2242 = vadd.f32 %v2238, %v2234
      %v2243 = vadd.f32 %v2239, %v2235
      %v2244 = vmax.f32 %v2240, 0.0
      %v2245 = vmax.f32 %v2241, 0.0
      %v2246 = vmax.f32 %v2242, 0.0
      %v2247 = vmax.f32 %v2243, 0.0
      %2248 = vst [vmem:[%s386] sm:$0xff] %v2244
      %2249 = vst [vmem:[%s386 + $0x8] sm:$0xff] %v2245
      %2250 = vst [vmem:[%s386 + $0x10] sm:$0xff] %v2246
      %2251 = vst [vmem:[%s386 + $0x18] sm:$0xff] %v2247
      %p2252 = scmp.lt.s32.totalorder %s22, 1
      %s2253 = scalar_select %p2252, %s22, 1
      %s2254 = smul.addr %s2253, 4
      %s2255 = smul.addr %s2254, 8
      %s2256 = scalar_lea.vmem %s11, %s2255
      // Predicated region
      $region65: #{eeb_forward.1} parent=63 // pred_check
        %p2257 = pneg %p276
      $region66: #{eeb_forward.1} parent=63 // pred_check_branch
        %2259 = sbr.rel (%p2257) target = $region68
      $region67: #{eeb_forward.1} parent=63 // pred_region
        _
      $region68: #{eeb_forward.1} parent=63 // pred_fallthru
        _
    $region64: #{eeb_forward.1} parent=5 // pred_fallthru
      _
    %p2260 = scmp.le.s32.totalorder 2, %s17
    // Predicated region
    $region69: #{eeb_forward.1} parent=5 // pred_check
      %p2261 = pneg %p2260
    $region70: #{eeb_forward.1} parent=5 // pred_check_branch
      %2263 = sbr.rel (%p2261) target = $region72
    $region71: #{eeb_forward.1} parent=5 // pred_region
      %s2264 = ssub.s32 %s17, 2
      // Predicated region
      $region73: #{eeb_forward.1} parent=71 // pred_check
        %p2265 = pneg %p282
      $region74: #{eeb_forward.1} parent=71 // pred_check_branch
        %2267 = sbr.rel (%p2265) target = $region76
      $region75: #{eeb_forward.1} parent=71 // pred_region
        %p2268 = scmp.lt.s32.totalorder %s23, 1
        %s2269 = scalar_select %p2268, %s23, 1
        %s2270 = smul.addr %s2269, 4
        %s2271 = smul.addr %s2270, 8
        %s2272 = scalar_lea.vmem %s11, %s2271
      $region76: #{eeb_forward.1} parent=71 // pred_fallthru
        _
    $region72: #{eeb_forward.1} parent=5 // pred_fallthru
      _
  $region6: #{eeb_forward.1} parent=0 // loop_footer
    %s21 = sadd.s32 1, %s17
  $region7: #{eeb_forward.1} parent=0 // loop_footer_branch
    %16 = sbr.rel target = $region3
  $region8: #{eeb_forward.1} parent=0 // loop_exit
    _

</llo_original>
